<compile_context>
chip_gen: v6e
topology: v6e:2x2x1
jax: 0.10.0
libtpu: 0.0.40
codegen_flags: <defaults>
</compile_context>

<pallas_src>
import math
import functools

import jax
import jax.numpy as jnp
from jax.experimental import pallas as pl
from jax.experimental.pallas import tpu as pltpu


# ----------------------------- in-kernel math -----------------------------

def _layernorm(x, gamma, beta, eps=1e-6):
    # Matches bert_pytorch LayerNorm: unbiased std, eps added to std (not var).
    mean = jnp.mean(x, axis=-1, keepdims=True)
    d = x - mean
    var = jnp.sum(d * d, axis=-1, keepdims=True) / (x.shape[-1] - 1)
    std = jnp.sqrt(var)
    return gamma * (d * pl.reciprocal(std + eps, approx=True)) + beta


def _gelu(x):
    # bert_pytorch GELU (tanh approximation).
    return 0.5 * x * (1.0 + jnp.tanh(math.sqrt(2.0 / math.pi)
                                     * (x + 0.044715 * x * x * x)))


def transformer_block_kernel(lens_ref,                      # scalar prefetch (SMEM)
                             x_ref,
                             ln1g_ref, ln1b_ref,
                             wqkv_ref, bqkv_ref,
                             wo_ref, bo_ref,
                             ln2g_ref, ln2b_ref,
                             w1_ref, b1_ref, w2_ref, b2_ref,
                             o_ref,
                             *, n_heads):
    b = pl.program_id(0)
    length = lens_ref[b]                    # valid sequence length of this batch row
    x = x_ref[0].astype(jnp.float32)        # (S, H), residual stream kept f32
    S, H = x.shape
    dh = H // n_heads
    scale = 1.0 / math.sqrt(dh)

    # ---------------- attention sublayer: x + Attn(LN(x)) ----------------
    xn = _layernorm(x, ln1g_ref[...], ln1b_ref[...])
    # Fused QKV projection: one MXU matmul with N = 3H (bf16 in, f32 acc).
    qkv = jnp.dot(xn.astype(jnp.bfloat16), wqkv_ref[...],
                  preferred_element_type=jnp.float32) + bqkv_ref[...]
    q = (qkv[:, 0:H] * scale).astype(jnp.bfloat16)   # scale folded into q once
    k = qkv[:, H:2 * H].astype(jnp.bfloat16)
    v = qkv[:, 2 * H:3 * H].astype(jnp.bfloat16)

    # Head split via static lane slices stacked on a new leading (batch) axis.
    # TODO(synk): at multiple-of-128 head dims a reshape+minor-transpose would
    #             avoid the sub-lane-width slices; kept slice/stack for robust
    #             lowering at arbitrary dh.
    def split_heads(t):  # (S, H) -> (n_heads, S, dh)
        return jnp.stack([t[:, h * dh:(h + 1) * dh] for h in range(n_heads)],
                         axis=0)

    q3, k3, v3 = split_heads(q), split_heads(k), split_heads(v)

    # Batched scores for all heads in a single MXU call.
    scores = jnp.einsum('hsd,htd->hst', q3, k3,
                        preferred_element_type=jnp.float32)        # (nh, S, S)

    # Key-padding mask (positions >= length), same semantics as
    # masked_fill(mask == 0, -1e9) in bert_pytorch.
    key_idx = jax.lax.broadcasted_iota(jnp.int32, (S, S), 1)
    key_valid = (key_idx < length)[None, :, :]
    scores = jnp.where(key_valid, scores, -1e9)

    # Softmax in f32 (mask, max-sub, exp); divide on the EUP.
    scores = scores - jnp.max(scores, axis=-1, keepdims=True)
    p = jnp.exp(scores)
    p = p * pl.reciprocal(jnp.sum(p, axis=-1, keepdims=True), approx=True)

    # Batched p @ v for all heads (bf16 probs, f32 accumulate).
    ctx = jnp.einsum('hst,htd->hsd', p.astype(jnp.bfloat16), v3,
                     preferred_element_type=jnp.float32)           # (nh, S, dh)

    attn = jnp.concatenate([ctx[h] for h in range(n_heads)], axis=-1)  # (S, H)
    attn = jnp.dot(attn.astype(jnp.bfloat16), wo_ref[...],
                   preferred_element_type=jnp.float32) + bo_ref[...]
    x = x + attn

    # ---------------- feed-forward sublayer: x + FFN(LN(x)) --------------
    xn2 = _layernorm(x, ln2g_ref[...], ln2b_ref[...])
    hid = _gelu(jnp.dot(xn2.astype(jnp.bfloat16), w1_ref[...],
                        preferred_element_type=jnp.float32) + b1_ref[...])
    ff = jnp.dot(hid.astype(jnp.bfloat16), w2_ref[...],
                 preferred_element_type=jnp.float32) + b2_ref[...]

    o_ref[0] = (x + ff).astype(o_ref.dtype)


# ----------------------------- pallas wrapper -----------------------------

def transformer_block(x, lengths, p, n_heads, out_dtype=jnp.bfloat16):
    B, S, H = x.shape
    FF = p["w1"].shape[1]

    def full_spec(shape):
        nd = len(shape)
        return pl.BlockSpec(shape, lambda b, lens, _nd=nd: (0,) * _nd)

    in_specs = [
        pl.BlockSpec((1, S, H), lambda b, lens: (b, 0, 0)),   # x
        full_spec((1, H)), full_spec((1, H)),                 # ln1 gamma/beta
        full_spec((H, 3 * H)), full_spec((1, 3 * H)),         # wqkv, bqkv (fused)
        full_spec((H, H)), full_spec((1, H)),                 # wo, bo
        full_spec((1, H)), full_spec((1, H)),                 # ln2 gamma/beta
        full_spec((H, FF)), full_spec((1, FF)),               # w1, b1
        full_spec((FF, H)), full_spec((1, H)),                # w2, b2
    ]
    out_spec = pl.BlockSpec((1, S, H), lambda b, lens: (b, 0, 0))

    kernel = functools.partial(transformer_block_kernel, n_heads=n_heads)
    return pl.pallas_call(
        kernel,
        out_shape=jax.ShapeDtypeStruct((B, S, H), out_dtype),
        grid_spec=pltpu.PrefetchScalarGridSpec(
            num_scalar_prefetch=1,
            grid=(B,),
            in_specs=in_specs,
            out_specs=out_spec,
        ),
        compiler_params=pltpu.CompilerParams(
            dimension_semantics=("parallel",),
            vmem_limit_bytes=48 * 1024 * 1024,
        ),
    )(lengths, x,
      p["ln1_g"], p["ln1_b"],
      p["wqkv"], p["bqkv"], p["wo"], p["bo"],
      p["ln2_g"], p["ln2_b"],
      p["w1"], p["b1"], p["w2"], p["b2"])


# ----------------------------- embeddings (glue) ---------------------------

def sinusoidal_pe(max_len, d_model):
    position = jnp.arange(max_len, dtype=jnp.float32)[:, None]
    div_term = jnp.exp(jnp.arange(0, d_model, 2, dtype=jnp.float32)
                       * -(math.log(10000.0) / d_model))
    pe = jnp.zeros((max_len, d_model), dtype=jnp.float32)
    pe = pe.at[:, 0::2].set(jnp.sin(position * div_term))
    pe = pe.at[:, 1::2].set(jnp.cos(position * div_term))
    return pe


def bert_embedding(tokens, segments, emb):
    # TODO(synk): data-dependent row gather kept in plain JAX (glue), not Pallas.
    tok = emb["token"][tokens]                      # (B, S, H)
    seg = emb["segment"][segments]                  # (B, S, H)
    pos = emb["pos"][None, :tokens.shape[1], :]     # (1, S, H)
    return tok + pos + seg                          # dropout = 0.0


# ----------------------------- parameter init ------------------------------

def init_params(key, vocab_size, hidden, n_layers, ff):
    keys = jax.random.split(key, 3 + n_layers)

    tok_emb = 0.02 * jax.random.normal(keys[0], (vocab_size, hidden), jnp.float32)
    tok_emb = tok_emb.at[0].set(0.0)                # padding_idx=0
    seg_emb = 0.02 * jax.random.normal(keys[1], (3, hidden), jnp.float32)
    seg_emb = seg_emb.at[0].set(0.0)                # padding_idx=0
    emb = {"token": tok_emb, "segment": seg_emb, "pos": sinusoidal_pe(512, hidden)}

    layers = []
    for li in range(n_layers):
        ks = jax.random.split(keys[3 + li], 6)

        def mat(k, m, n):
            return 0.02 * jax.random.normal(k, (m, n), jnp.float32)

        wqkv = jnp.concatenate([mat(ks[0], hidden, hidden),
                                mat(ks[1], hidden, hidden),
                                mat(ks[2], hidden, hidden)], axis=1)   # (H, 3H)
        layers.append({
            "ln1_g": jnp.ones((1, hidden), jnp.float32),
            "ln1_b": jnp.zeros((1, hidden), jnp.float32),
            "wqkv": wqkv.astype(jnp.bfloat16),
            "bqkv": jnp.zeros((1, 3 * hidden), jnp.float32),
            "wo": mat(ks[3], hidden, hidden).astype(jnp.bfloat16),
            "bo": jnp.zeros((1, hidden), jnp.float32),
            "ln2_g": jnp.ones((1, hidden), jnp.float32),
            "ln2_b": jnp.zeros((1, hidden), jnp.float32),
            "w1": mat(ks[4], hidden, ff).astype(jnp.bfloat16),
            "b1": jnp.zeros((1, ff), jnp.float32),
            "w2": mat(ks[5], ff, hidden).astype(jnp.bfloat16),
            "b2": jnp.zeros((1, hidden), jnp.float32),
        })
    return emb, layers


def bert_forward(tokens, segments, lengths, emb, layers, n_heads):
    # Inter-layer activations carried in bf16 (halves layer-boundary HBM traffic);
    # final layer emits f32.
    x = bert_embedding(tokens, segments, emb).astype(jnp.bfloat16)
    n = len(layers)
    for i, p in enumerate(layers):
        out_dtype = jnp.float32 if i == n - 1 else jnp.bfloat16
        x = transformer_block(x, lengths, p, n_heads, out_dtype=out_dtype)
    return x


# ----------------------------------- main -----------------------------------

if __name__ == "__main__":
    VOCAB, HIDDEN, N_LAYERS, N_HEADS = 30, 32, 2, 4
    B, S = 2, 8
    FF = 4 * HIDDEN

    key = jax.random.PRNGKey(0)
    k_emb, k_tok, k_seg = jax.random.split(key, 3)

    emb, layers = init_params(k_emb, VOCAB, HIDDEN, N_LAYERS, FF)

    lengths = jnp.array([8, 5], dtype=jnp.int32)
    pos_idx = jnp.arange(S)[None, :]
    valid = pos_idx < lengths[:, None]

    tokens = jax.random.randint(k_tok, (B, S), 1, VOCAB).astype(jnp.int32)
    tokens = jnp.where(valid, tokens, 0)                       # pad with 0
    segments = jax.random.randint(k_seg, (B, S), 1, 3).astype(jnp.int32)
    segments = jnp.where(valid, segments, 0)

    out = bert_forward(tokens, segments, lengths, emb, layers, N_HEADS)
    out = jax.block_until_ready(out)
    assert out.shape == (B, S, HIDDEN) and out.dtype == jnp.float32
    assert bool(jnp.all(jnp.isfinite(out)))
    print("KERNEL_OK")
</pallas_src>

<mosaic_0001>
module attributes {stable_mosaic.version = 11 : i64} {
  func.func @transformer_block_kernel(%arg0: i32, %arg1: memref<2xi32, #tpu.memory_space<smem>>, %arg2: memref<1x8x32xbf16, #tpu.memory_space<vmem>>, %arg3: memref<1x32xf32, #tpu.memory_space<vmem>>, %arg4: memref<1x32xf32, #tpu.memory_space<vmem>>, %arg5: memref<32x96xbf16, #tpu.memory_space<vmem>>, %arg6: memref<1x96xf32, #tpu.memory_space<vmem>>, %arg7: memref<32x32xbf16, #tpu.memory_space<vmem>>, %arg8: memref<1x32xf32, #tpu.memory_space<vmem>>, %arg9: memref<1x32xf32, #tpu.memory_space<vmem>>, %arg10: memref<1x32xf32, #tpu.memory_space<vmem>>, %arg11: memref<32x128xbf16, #tpu.memory_space<vmem>>, %arg12: memref<1x128xf32, #tpu.memory_space<vmem>>, %arg13: memref<128x32xbf16, #tpu.memory_space<vmem>>, %arg14: memref<1x32xf32, #tpu.memory_space<vmem>>, %arg15: memref<1x8x32xbf16, #tpu.memory_space<vmem>>) attributes {dimension_semantics = [#tpu.dimension_semantics<parallel>], iteration_bounds = array<i64: 2>, scalar_prefetch = 1 : i64, scratch_operands = 0 : i64, tpu.core_type = #tpu.core_type<tc>, window_params = [{transform_indices = @transform_0, window_bounds = array<i64: 1, 8, 32>}, {pipeline_mode = #tpu.pipeline_mode<synchronous>, transform_indices = @transform_1, window_bounds = array<i64: 1, 32>}, {pipeline_mode = #tpu.pipeline_mode<synchronous>, transform_indices = @transform_2, window_bounds = array<i64: 1, 32>}, {pipeline_mode = #tpu.pipeline_mode<synchronous>, transform_indices = @transform_3, window_bounds = array<i64: 32, 96>}, {pipeline_mode = #tpu.pipeline_mode<synchronous>, transform_indices = @transform_4, window_bounds = array<i64: 1, 96>}, {pipeline_mode = #tpu.pipeline_mode<synchronous>, transform_indices = @transform_5, window_bounds = array<i64: 32, 32>}, {pipeline_mode = #tpu.pipeline_mode<synchronous>, transform_indices = @transform_6, window_bounds = array<i64: 1, 32>}, {pipeline_mode = #tpu.pipeline_mode<synchronous>, transform_indices = @transform_7, window_bounds = array<i64: 1, 32>}, {pipeline_mode = #tpu.pipeline_mode<synchronous>, transform_indices = @transform_8, window_bounds = array<i64: 1, 32>}, {pipeline_mode = #tpu.pipeline_mode<synchronous>, transform_indices = @transform_9, window_bounds = array<i64: 32, 128>}, {pipeline_mode = #tpu.pipeline_mode<synchronous>, transform_indices = @transform_10, window_bounds = array<i64: 1, 128>}, {pipeline_mode = #tpu.pipeline_mode<synchronous>, transform_indices = @transform_11, window_bounds = array<i64: 128, 32>}, {pipeline_mode = #tpu.pipeline_mode<synchronous>, transform_indices = @transform_12, window_bounds = array<i64: 1, 32>}, {transform_indices = @transform_13, window_bounds = array<i64: 1, 8, 32>}]} {
    %0 = arith.index_cast %arg0 : i32 to index
    %1 = memref.load %arg1[%0] : memref<2xi32, #tpu.memory_space<smem>>
    %c0 = arith.constant 0 : index
    %c0_0 = arith.constant 0 : index
    %c0_1 = arith.constant 0 : index
    %2 = vector.load %arg2[%c0, %c0_0, %c0_1] : memref<1x8x32xbf16, #tpu.memory_space<vmem>>, vector<1x8x32xbf16>
    %3 = vector.shape_cast %2 : vector<1x8x32xbf16> to vector<8x32xbf16>
    %4 = arith.extf %3 : vector<8x32xbf16> to vector<8x32xf32>
    %c0_2 = arith.constant 0 : index
    %c0_3 = arith.constant 0 : index
    %5 = vector.load %arg3[%c0_2, %c0_3] : memref<1x32xf32, #tpu.memory_space<vmem>>, vector<1x32xf32>
    %c0_4 = arith.constant 0 : index
    %c0_5 = arith.constant 0 : index
    %6 = vector.load %arg4[%c0_4, %c0_5] : memref<1x32xf32, #tpu.memory_space<vmem>>, vector<1x32xf32>
    %cst = arith.constant dense<0.000000e+00> : vector<8xf32>
    %7 = vector.multi_reduction <add>, %4, %cst [1] : vector<8x32xf32> to vector<8xf32>
    %8 = vector.shape_cast %7 : vector<8xf32> to vector<8x1xf32>
    %cst_6 = arith.constant 3.200000e+01 : f32
    %9 = vector.broadcast %cst_6 : f32 to vector<8x1xf32>
    %10 = arith.divf %8, %9 : vector<8x1xf32>
    %11 = vector.broadcast %10 : vector<8x1xf32> to vector<8x32xf32>
    %12 = arith.subf %4, %11 : vector<8x32xf32>
    %13 = arith.mulf %12, %12 : vector<8x32xf32>
    %cst_7 = arith.constant dense<0.000000e+00> : vector<8xf32>
    %14 = vector.multi_reduction <add>, %13, %cst_7 [1] : vector<8x32xf32> to vector<8xf32>
    %15 = vector.shape_cast %14 : vector<8xf32> to vector<8x1xf32>
    %cst_8 = arith.constant 3.100000e+01 : f32
    %16 = vector.broadcast %cst_8 : f32 to vector<8x1xf32>
    %17 = arith.divf %15, %16 : vector<8x1xf32>
    %18 = math.sqrt %17 : vector<8x1xf32>
    %cst_9 = arith.constant 9.99999997E-7 : f32
    %19 = vector.broadcast %cst_9 : f32 to vector<8x1xf32>
    %20 = arith.addf %18, %19 : vector<8x1xf32>
    %21 = tpu.reciprocal %20 {approx = true} : vector<8x1xf32> -> vector<8x1xf32>
    %22 = vector.broadcast %21 : vector<8x1xf32> to vector<8x32xf32>
    %23 = arith.mulf %12, %22 : vector<8x32xf32>
    %24 = vector.broadcast %5 : vector<1x32xf32> to vector<8x32xf32>
    %25 = arith.mulf %24, %23 : vector<8x32xf32>
    %26 = vector.broadcast %6 : vector<1x32xf32> to vector<8x32xf32>
    %27 = arith.addf %25, %26 : vector<8x32xf32>
    %28 = arith.truncf %27 : vector<8x32xf32> to vector<8x32xbf16>
    %c0_10 = arith.constant 0 : index
    %c0_11 = arith.constant 0 : index
    %29 = vector.load %arg5[%c0_10, %c0_11] : memref<32x96xbf16, #tpu.memory_space<vmem>>, vector<32x96xbf16>
    %cst_12 = arith.constant dense<0.000000e+00> : vector<8x96xf32>
    %30 = tpu.matmul %28, %29, %cst_12 {dimension_numbers = #tpu.dot_dimension_numbers<[1], [0], [0], [1], [0, 0, 1, 1], [], []>} : vector<8x32xbf16>, vector<32x96xbf16>, vector<8x96xf32> -> vector<8x96xf32>
    %c0_13 = arith.constant 0 : index
    %c0_14 = arith.constant 0 : index
    %31 = vector.load %arg6[%c0_13, %c0_14] : memref<1x96xf32, #tpu.memory_space<vmem>>, vector<1x96xf32>
    %32 = vector.broadcast %31 : vector<1x96xf32> to vector<8x96xf32>
    %33 = arith.addf %30, %32 : vector<8x96xf32>
    %34 = vector.extract_strided_slice %33 {offsets = [0, 0], sizes = [8, 32], strides = [1, 1]} : vector<8x96xf32> to vector<8x32xf32>
    %cst_15 = arith.constant 0.353553385 : f32
    %35 = vector.broadcast %cst_15 : f32 to vector<8x32xf32>
    %36 = arith.mulf %34, %35 : vector<8x32xf32>
    %37 = arith.truncf %36 : vector<8x32xf32> to vector<8x32xbf16>
    %38 = vector.extract_strided_slice %33 {offsets = [0, 32], sizes = [8, 32], strides = [1, 1]} : vector<8x96xf32> to vector<8x32xf32>
    %39 = arith.truncf %38 : vector<8x32xf32> to vector<8x32xbf16>
    %40 = vector.extract_strided_slice %33 {offsets = [0, 64], sizes = [8, 32], strides = [1, 1]} : vector<8x96xf32> to vector<8x32xf32>
    %41 = arith.truncf %40 : vector<8x32xf32> to vector<8x32xbf16>
    %42 = vector.extract_strided_slice %37 {offsets = [0, 0], sizes = [8, 8], strides = [1, 1]} : vector<8x32xbf16> to vector<8x8xbf16>
    %43 = vector.extract_strided_slice %37 {offsets = [0, 8], sizes = [8, 8], strides = [1, 1]} : vector<8x32xbf16> to vector<8x8xbf16>
    %44 = vector.extract_strided_slice %37 {offsets = [0, 16], sizes = [8, 8], strides = [1, 1]} : vector<8x32xbf16> to vector<8x8xbf16>
    %45 = vector.extract_strided_slice %37 {offsets = [0, 24], sizes = [8, 8], strides = [1, 1]} : vector<8x32xbf16> to vector<8x8xbf16>
    %46 = vector.shape_cast %42 : vector<8x8xbf16> to vector<1x8x8xbf16>
    %47 = vector.shape_cast %43 : vector<8x8xbf16> to vector<1x8x8xbf16>
    %48 = vector.shape_cast %44 : vector<8x8xbf16> to vector<1x8x8xbf16>
    %49 = vector.shape_cast %45 : vector<8x8xbf16> to vector<1x8x8xbf16>
    %50 = tpu.concatenate %46, %47, %48, %49 in 0 : vector<1x8x8xbf16>, vector<1x8x8xbf16>, vector<1x8x8xbf16>, vector<1x8x8xbf16> -> vector<4x8x8xbf16>
    %51 = vector.extract_strided_slice %39 {offsets = [0, 0], sizes = [8, 8], strides = [1, 1]} : vector<8x32xbf16> to vector<8x8xbf16>
    %52 = vector.extract_strided_slice %39 {offsets = [0, 8], sizes = [8, 8], strides = [1, 1]} : vector<8x32xbf16> to vector<8x8xbf16>
    %53 = vector.extract_strided_slice %39 {offsets = [0, 16], sizes = [8, 8], strides = [1, 1]} : vector<8x32xbf16> to vector<8x8xbf16>
    %54 = vector.extract_strided_slice %39 {offsets = [0, 24], sizes = [8, 8], strides = [1, 1]} : vector<8x32xbf16> to vector<8x8xbf16>
    %55 = vector.shape_cast %51 : vector<8x8xbf16> to vector<1x8x8xbf16>
    %56 = vector.shape_cast %52 : vector<8x8xbf16> to vector<1x8x8xbf16>
    %57 = vector.shape_cast %53 : vector<8x8xbf16> to vector<1x8x8xbf16>
    %58 = vector.shape_cast %54 : vector<8x8xbf16> to vector<1x8x8xbf16>
    %59 = tpu.concatenate %55, %56, %57, %58 in 0 : vector<1x8x8xbf16>, vector<1x8x8xbf16>, vector<1x8x8xbf16>, vector<1x8x8xbf16> -> vector<4x8x8xbf16>
    %60 = vector.extract_strided_slice %41 {offsets = [0, 0], sizes = [8, 8], strides = [1, 1]} : vector<8x32xbf16> to vector<8x8xbf16>
    %61 = vector.extract_strided_slice %41 {offsets = [0, 8], sizes = [8, 8], strides = [1, 1]} : vector<8x32xbf16> to vector<8x8xbf16>
    %62 = vector.extract_strided_slice %41 {offsets = [0, 16], sizes = [8, 8], strides = [1, 1]} : vector<8x32xbf16> to vector<8x8xbf16>
    %63 = vector.extract_strided_slice %41 {offsets = [0, 24], sizes = [8, 8], strides = [1, 1]} : vector<8x32xbf16> to vector<8x8xbf16>
    %64 = vector.shape_cast %60 : vector<8x8xbf16> to vector<1x8x8xbf16>
    %65 = vector.shape_cast %61 : vector<8x8xbf16> to vector<1x8x8xbf16>
    %66 = vector.shape_cast %62 : vector<8x8xbf16> to vector<1x8x8xbf16>
    %67 = vector.shape_cast %63 : vector<8x8xbf16> to vector<1x8x8xbf16>
    %68 = tpu.concatenate %64, %65, %66, %67 in 0 : vector<1x8x8xbf16>, vector<1x8x8xbf16>, vector<1x8x8xbf16>, vector<1x8x8xbf16> -> vector<4x8x8xbf16>
    "tpu.trace_start"() <{level = 10 : i32, message = "hsd,htd->hst"}> : () -> ()
    %cst_16 = arith.constant dense<0.000000e+00> : vector<4x8x8xf32>
    %69 = tpu.matmul %50, %59, %cst_16 {dimension_numbers = #tpu.dot_dimension_numbers<[2], [2], [1], [1], [0, 0, 0, 1, 1, 1], [0], [0]>} : vector<4x8x8xbf16>, vector<4x8x8xbf16>, vector<4x8x8xf32> -> vector<4x8x8xf32>
    "tpu.trace_stop"() : () -> ()
    %70 = tpu.iota {dimensions = array<i32: 1>} : vector<8x8xi32>
    %71 = vector.broadcast %1 : i32 to vector<8x8xi32>
    %72 = arith.cmpi slt, %70, %71 : vector<8x8xi32>
    %73 = vector.shape_cast %72 : vector<8x8xi1> to vector<1x8x8xi1>
    %cst_17 = arith.constant -1.000000e+09 : f32
    %74 = vector.shape_cast %73 : vector<1x8x8xi1> to vector<1x8x8xi1>
    %75 = vector.broadcast %74 : vector<1x8x8xi1> to vector<4x8x8xi1>
    %76 = vector.broadcast %cst_17 : f32 to vector<4x8x8xf32>
    %77 = arith.select %75, %69, %76 : vector<4x8x8xi1>, vector<4x8x8xf32>
    %cst_18 = arith.constant dense<0xFF800000> : vector<4x8xf32>
    %78 = vector.multi_reduction <maximumf>, %77, %cst_18 [2] : vector<4x8x8xf32> to vector<4x8xf32>
    %79 = vector.shape_cast %78 : vector<4x8xf32> to vector<4x8x1xf32>
    %80 = vector.broadcast %79 : vector<4x8x1xf32> to vector<4x8x8xf32>
    %81 = arith.subf %77, %80 : vector<4x8x8xf32>
    %82 = math.exp %81 : vector<4x8x8xf32>
    %cst_19 = arith.constant dense<0.000000e+00> : vector<4x8xf32>
    %83 = vector.multi_reduction <add>, %82, %cst_19 [2] : vector<4x8x8xf32> to vector<4x8xf32>
    %84 = vector.shape_cast %83 : vector<4x8xf32> to vector<4x8x1xf32>
    %85 = tpu.reciprocal %84 {approx = true} : vector<4x8x1xf32> -> vector<4x8x1xf32>
    %86 = vector.broadcast %85 : vector<4x8x1xf32> to vector<4x8x8xf32>
    %87 = arith.mulf %82, %86 : vector<4x8x8xf32>
    %88 = arith.truncf %87 : vector<4x8x8xf32> to vector<4x8x8xbf16>
    "tpu.trace_start"() <{level = 10 : i32, message = "hst,htd->hsd"}> : () -> ()
    %cst_20 = arith.constant dense<0.000000e+00> : vector<4x8x8xf32>
    %89 = tpu.matmul %88, %68, %cst_20 {dimension_numbers = #tpu.dot_dimension_numbers<[2], [1], [1], [2], [0, 0, 0, 1, 1, 2], [0], [0]>} : vector<4x8x8xbf16>, vector<4x8x8xbf16>, vector<4x8x8xf32> -> vector<4x8x8xf32>
    "tpu.trace_stop"() : () -> ()
    %90 = vector.extract_strided_slice %89 {offsets = [0, 0, 0], sizes = [1, 8, 8], strides = [1, 1, 1]} : vector<4x8x8xf32> to vector<1x8x8xf32>
    %91 = vector.shape_cast %90 : vector<1x8x8xf32> to vector<8x8xf32>
    %92 = vector.extract_strided_slice %89 {offsets = [1, 0, 0], sizes = [1, 8, 8], strides = [1, 1, 1]} : vector<4x8x8xf32> to vector<1x8x8xf32>
    %93 = vector.shape_cast %92 : vector<1x8x8xf32> to vector<8x8xf32>
    %94 = vector.extract_strided_slice %89 {offsets = [2, 0, 0], sizes = [1, 8, 8], strides = [1, 1, 1]} : vector<4x8x8xf32> to vector<1x8x8xf32>
    %95 = vector.shape_cast %94 : vector<1x8x8xf32> to vector<8x8xf32>
    %96 = vector.extract_strided_slice %89 {offsets = [3, 0, 0], sizes = [1, 8, 8], strides = [1, 1, 1]} : vector<4x8x8xf32> to vector<1x8x8xf32>
    %97 = vector.shape_cast %96 : vector<1x8x8xf32> to vector<8x8xf32>
    %98 = tpu.concatenate %91, %93, %95, %97 in 1 : vector<8x8xf32>, vector<8x8xf32>, vector<8x8xf32>, vector<8x8xf32> -> vector<8x32xf32>
    %99 = arith.truncf %98 : vector<8x32xf32> to vector<8x32xbf16>
    %c0_21 = arith.constant 0 : index
    %c0_22 = arith.constant 0 : index
    %100 = vector.load %arg7[%c0_21, %c0_22] : memref<32x32xbf16, #tpu.memory_space<vmem>>, vector<32x32xbf16>
    %cst_23 = arith.constant dense<0.000000e+00> : vector<8x32xf32>
    %101 = tpu.matmul %99, %100, %cst_23 {dimension_numbers = #tpu.dot_dimension_numbers<[1], [0], [0], [1], [0, 0, 1, 1], [], []>} : vector<8x32xbf16>, vector<32x32xbf16>, vector<8x32xf32> -> vector<8x32xf32>
    %c0_24 = arith.constant 0 : index
    %c0_25 = arith.constant 0 : index
    %102 = vector.load %arg8[%c0_24, %c0_25] : memref<1x32xf32, #tpu.memory_space<vmem>>, vector<1x32xf32>
    %103 = vector.broadcast %102 : vector<1x32xf32> to vector<8x32xf32>
    %104 = arith.addf %101, %103 : vector<8x32xf32>
    %105 = arith.addf %4, %104 : vector<8x32xf32>
    %c0_26 = arith.constant 0 : index
    %c0_27 = arith.constant 0 : index
    %106 = vector.load %arg9[%c0_26, %c0_27] : memref<1x32xf32, #tpu.memory_space<vmem>>, vector<1x32xf32>
    %c0_28 = arith.constant 0 : index
    %c0_29 = arith.constant 0 : index
    %107 = vector.load %arg10[%c0_28, %c0_29] : memref<1x32xf32, #tpu.memory_space<vmem>>, vector<1x32xf32>
    %cst_30 = arith.constant dense<0.000000e+00> : vector<8xf32>
    %108 = vector.multi_reduction <add>, %105, %cst_30 [1] : vector<8x32xf32> to vector<8xf32>
    %109 = vector.shape_cast %108 : vector<8xf32> to vector<8x1xf32>
    %cst_31 = arith.constant 3.200000e+01 : f32
    %110 = vector.broadcast %cst_31 : f32 to vector<8x1xf32>
    %111 = arith.divf %109, %110 : vector<8x1xf32>
    %112 = vector.broadcast %111 : vector<8x1xf32> to vector<8x32xf32>
    %113 = arith.subf %105, %112 : vector<8x32xf32>
    %114 = arith.mulf %113, %113 : vector<8x32xf32>
    %cst_32 = arith.constant dense<0.000000e+00> : vector<8xf32>
    %115 = vector.multi_reduction <add>, %114, %cst_32 [1] : vector<8x32xf32> to vector<8xf32>
    %116 = vector.shape_cast %115 : vector<8xf32> to vector<8x1xf32>
    %cst_33 = arith.constant 3.100000e+01 : f32
    %117 = vector.broadcast %cst_33 : f32 to vector<8x1xf32>
    %118 = arith.divf %116, %117 : vector<8x1xf32>
    %119 = math.sqrt %118 : vector<8x1xf32>
    %cst_34 = arith.constant 9.99999997E-7 : f32
    %120 = vector.broadcast %cst_34 : f32 to vector<8x1xf32>
    %121 = arith.addf %119, %120 : vector<8x1xf32>
    %122 = tpu.reciprocal %121 {approx = true} : vector<8x1xf32> -> vector<8x1xf32>
    %123 = vector.broadcast %122 : vector<8x1xf32> to vector<8x32xf32>
    %124 = arith.mulf %113, %123 : vector<8x32xf32>
    %125 = vector.broadcast %106 : vector<1x32xf32> to vector<8x32xf32>
    %126 = arith.mulf %125, %124 : vector<8x32xf32>
    %127 = vector.broadcast %107 : vector<1x32xf32> to vector<8x32xf32>
    %128 = arith.addf %126, %127 : vector<8x32xf32>
    %129 = arith.truncf %128 : vector<8x32xf32> to vector<8x32xbf16>
    %c0_35 = arith.constant 0 : index
    %c0_36 = arith.constant 0 : index
    %130 = vector.load %arg11[%c0_35, %c0_36] : memref<32x128xbf16, #tpu.memory_space<vmem>>, vector<32x128xbf16>
    %cst_37 = arith.constant dense<0.000000e+00> : vector<8x128xf32>
    %131 = tpu.matmul %129, %130, %cst_37 {dimension_numbers = #tpu.dot_dimension_numbers<[1], [0], [0], [1], [0, 0, 1, 1], [], []>} : vector<8x32xbf16>, vector<32x128xbf16>, vector<8x128xf32> -> vector<8x128xf32>
    %c0_38 = arith.constant 0 : index
    %c0_39 = arith.constant 0 : index
    %132 = vector.load %arg12[%c0_38, %c0_39] : memref<1x128xf32, #tpu.memory_space<vmem>>, vector<1x128xf32>
    %133 = vector.broadcast %132 : vector<1x128xf32> to vector<8x128xf32>
    %134 = arith.addf %131, %133 : vector<8x128xf32>
    %cst_40 = arith.constant 5.000000e-01 : f32
    %135 = vector.broadcast %cst_40 : f32 to vector<8x128xf32>
    %136 = arith.mulf %135, %134 : vector<8x128xf32>
    %cst_41 = arith.constant 4.471500e-02 : f32
    %137 = vector.broadcast %cst_41 : f32 to vector<8x128xf32>
    %138 = arith.mulf %137, %134 : vector<8x128xf32>
    %139 = arith.mulf %138, %134 : vector<8x128xf32>
    %140 = arith.mulf %139, %134 : vector<8x128xf32>
    %141 = arith.addf %134, %140 : vector<8x128xf32>
    %cst_42 = arith.constant 0.797884583 : f32
    %142 = vector.broadcast %cst_42 : f32 to vector<8x128xf32>
    %143 = arith.mulf %142, %141 : vector<8x128xf32>
    %144 = math.tanh %143 : vector<8x128xf32>
    %cst_43 = arith.constant 1.000000e+00 : f32
    %145 = vector.broadcast %cst_43 : f32 to vector<8x128xf32>
    %146 = arith.addf %145, %144 : vector<8x128xf32>
    %147 = arith.mulf %136, %146 : vector<8x128xf32>
    %148 = arith.truncf %147 : vector<8x128xf32> to vector<8x128xbf16>
    %c0_44 = arith.constant 0 : index
    %c0_45 = arith.constant 0 : index
    %149 = vector.load %arg13[%c0_44, %c0_45] : memref<128x32xbf16, #tpu.memory_space<vmem>>, vector<128x32xbf16>
    %cst_46 = arith.constant dense<0.000000e+00> : vector<8x32xf32>
    %150 = tpu.matmul %148, %149, %cst_46 {dimension_numbers = #tpu.dot_dimension_numbers<[1], [0], [0], [1], [0, 0, 1, 1], [], []>} : vector<8x128xbf16>, vector<128x32xbf16>, vector<8x32xf32> -> vector<8x32xf32>
    %c0_47 = arith.constant 0 : index
    %c0_48 = arith.constant 0 : index
    %151 = vector.load %arg14[%c0_47, %c0_48] : memref<1x32xf32, #tpu.memory_space<vmem>>, vector<1x32xf32>
    %152 = vector.broadcast %151 : vector<1x32xf32> to vector<8x32xf32>
    %153 = arith.addf %150, %152 : vector<8x32xf32>
    %154 = arith.addf %105, %153 : vector<8x32xf32>
    %155 = arith.truncf %154 : vector<8x32xf32> to vector<8x32xbf16>
    %c0_49 = arith.constant 0 : index
    %c0_50 = arith.constant 0 : index
    %c0_51 = arith.constant 0 : index
    %156 = vector.load %arg15[%c0_49, %c0_50, %c0_51] : memref<1x8x32xbf16, #tpu.memory_space<vmem>>, vector<1x8x32xbf16>
    %157 = vector.shape_cast %156 : vector<1x8x32xbf16> to vector<8x32xbf16>
    %158 = vector.shape_cast %155 : vector<8x32xbf16> to vector<1x8x32xbf16>
    tpu.vector_store %arg15[%c0_49, %c0_50, %c0_51], %158 {strides = array<i32>} : memref<1x8x32xbf16, #tpu.memory_space<vmem>>, vector<1x8x32xbf16>,
    return
  }
  func.func @transform_0(%arg0: i32, %arg1: memref<2xi32, #tpu.memory_space<smem>>) -> (i32, i32, i32) {
    %c0_i32 = arith.constant 0 : i32
    %c0_i32_0 = arith.constant 0 : i32
    %c0_i32_1 = arith.constant 0 : i32
    return %arg0, %c0_i32, %c0_i32_0 : i32, i32, i32
  }
  func.func @transform_1(%arg0: i32, %arg1: memref<2xi32, #tpu.memory_space<smem>>) -> (i32, i32) {
    %c0_i32 = arith.constant 0 : i32
    %c0_i32_0 = arith.constant 0 : i32
    %c0_i32_1 = arith.constant 0 : i32
    return %c0_i32, %c0_i32_0 : i32, i32
  }
  func.func @transform_2(%arg0: i32, %arg1: memref<2xi32, #tpu.memory_space<smem>>) -> (i32, i32) {
    %c0_i32 = arith.constant 0 : i32
    %c0_i32_0 = arith.constant 0 : i32
    %c0_i32_1 = arith.constant 0 : i32
    return %c0_i32, %c0_i32_0 : i32, i32
  }
  func.func @transform_3(%arg0: i32, %arg1: memref<2xi32, #tpu.memory_space<smem>>) -> (i32, i32) {
    %c0_i32 = arith.constant 0 : i32
    %c0_i32_0 = arith.constant 0 : i32
    %c0_i32_1 = arith.constant 0 : i32
    return %c0_i32, %c0_i32_0 : i32, i32
  }
  func.func @transform_4(%arg0: i32, %arg1: memref<2xi32, #tpu.memory_space<smem>>) -> (i32, i32) {
    %c0_i32 = arith.constant 0 : i32
    %c0_i32_0 = arith.constant 0 : i32
    %c0_i32_1 = arith.constant 0 : i32
    return %c0_i32, %c0_i32_0 : i32, i32
  }
  func.func @transform_5(%arg0: i32, %arg1: memref<2xi32, #tpu.memory_space<smem>>) -> (i32, i32) {
    %c0_i32 = arith.constant 0 : i32
    %c0_i32_0 = arith.constant 0 : i32
    %c0_i32_1 = arith.constant 0 : i32
    return %c0_i32, %c0_i32_0 : i32, i32
  }
  func.func @transform_6(%arg0: i32, %arg1: memref<2xi32, #tpu.memory_space<smem>>) -> (i32, i32) {
    %c0_i32 = arith.constant 0 : i32
    %c0_i32_0 = arith.constant 0 : i32
    %c0_i32_1 = arith.constant 0 : i32
    return %c0_i32, %c0_i32_0 : i32, i32
  }
  func.func @transform_7(%arg0: i32, %arg1: memref<2xi32, #tpu.memory_space<smem>>) -> (i32, i32) {
    %c0_i32 = arith.constant 0 : i32
    %c0_i32_0 = arith.constant 0 : i32
    %c0_i32_1 = arith.constant 0 : i32
    return %c0_i32, %c0_i32_0 : i32, i32
  }
  func.func @transform_8(%arg0: i32, %arg1: memref<2xi32, #tpu.memory_space<smem>>) -> (i32, i32) {
    %c0_i32 = arith.constant 0 : i32
    %c0_i32_0 = arith.constant 0 : i32
    %c0_i32_1 = arith.constant 0 : i32
    return %c0_i32, %c0_i32_0 : i32, i32
  }
  func.func @transform_9(%arg0: i32, %arg1: memref<2xi32, #tpu.memory_space<smem>>) -> (i32, i32) {
    %c0_i32 = arith.constant 0 : i32
    %c0_i32_0 = arith.constant 0 : i32
    %c0_i32_1 = arith.constant 0 : i32
    return %c0_i32, %c0_i32_0 : i32, i32
  }
  func.func @transform_10(%arg0: i32, %arg1: memref<2xi32, #tpu.memory_space<smem>>) -> (i32, i32) {
    %c0_i32 = arith.constant 0 : i32
    %c0_i32_0 = arith.constant 0 : i32
    %c0_i32_1 = arith.constant 0 : i32
    return %c0_i32, %c0_i32_0 : i32, i32
  }
  func.func @transform_11(%arg0: i32, %arg1: memref<2xi32, #tpu.memory_space<smem>>) -> (i32, i32) {
    %c0_i32 = arith.constant 0 : i32
    %c0_i32_0 = arith.constant 0 : i32
    %c0_i32_1 = arith.constant 0 : i32
    return %c0_i32, %c0_i32_0 : i32, i32
  }
  func.func @transform_12(%arg0: i32, %arg1: memref<2xi32, #tpu.memory_space<smem>>) -> (i32, i32) {
    %c0_i32 = arith.constant 0 : i32
    %c0_i32_0 = arith.constant 0 : i32
    %c0_i32_1 = arith.constant 0 : i32
    return %c0_i32, %c0_i32_0 : i32, i32
  }
  func.func @transform_13(%arg0: i32, %arg1: memref<2xi32, #tpu.memory_space<smem>>) -> (i32, i32, i32) {
    %c0_i32 = arith.constant 0 : i32
    %c0_i32_0 = arith.constant 0 : i32
    %c0_i32_1 = arith.constant 0 : i32
    return %arg0, %c0_i32, %c0_i32_0 : i32, i32, i32
  }
}

</mosaic_0001>

<llo_original>
// kernel: tpu_custom_call.1
$region0: #{tpu_custom_call.1}
  #allocation0 [shape = 'u32[]', space=smem, size = 0x4, offset = 0x4, fixed_abs, tag = 'smem constant byte address 0x4 - core index']
  #allocation1 [shape = 'u32[144,128]{1,0:T(1,128)}', space=vmem, size = 0x12000, scoped, tag = 'internal scratch']
  #allocation2 [shape = 's32[1]{0}', space=sflag, size = 0x4, scoped, tag = 'scoped memory for tpu_custom_call.1']
  #allocation3 [shape = 'u8[512]{0}', space=smem, size = 0x200, scoped, tag = 'prefetched SMEM operand 0']
  %s0 = inlined_call_operand.vmem [shape: s32[2], index: 0, kind: input, shape index: {}]
  %s1 = inlined_call_operand.vmem [shape: bf16[2,8,32], index: 1, kind: input, shape index: {}]
  %s2 = inlined_call_operand.vmem [shape: f32[1,32], index: 2, kind: input, shape index: {}]
  %s3 = inlined_call_operand.vmem [shape: f32[1,32], index: 3, kind: input, shape index: {}]
  %s4 = inlined_call_operand.vmem [shape: bf16[32,96], index: 4, kind: input, shape index: {}]
  %s5 = inlined_call_operand.vmem [shape: f32[1,96], index: 5, kind: input, shape index: {}]
  %s6 = inlined_call_operand.vmem [shape: bf16[32,32], index: 6, kind: input, shape index: {}]
  %s7 = inlined_call_operand.vmem [shape: f32[1,32], index: 7, kind: input, shape index: {}]
  %s8 = inlined_call_operand.vmem [shape: f32[1,32], index: 8, kind: input, shape index: {}]
  %s9 = inlined_call_operand.vmem [shape: f32[1,32], index: 9, kind: input, shape index: {}]
  %s10 = inlined_call_operand.vmem [shape: bf16[32,128], index: 10, kind: input, shape index: {}]
  %s11 = inlined_call_operand.vmem [shape: f32[1,128], index: 11, kind: input, shape index: {}]
  %s12 = inlined_call_operand.vmem [shape: bf16[128,32], index: 12, kind: input, shape index: {}]
  %s13 = inlined_call_operand.vmem [shape: f32[1,32], index: 13, kind: input, shape index: {}]
  %s14 = inlined_call_operand.hbm [shape: bf16[2,8,32], index: 14, kind: output, shape index: {}]
  %s15 = sld [smem:[#allocation0]]
  $region85: #{tpu_custom_call.1} parent=0
    _
  %s17 = ssub.s32 1, %s15
  %s18 = scalar_select 0, %s17, %s15
  %s19 = sshll.u32 %s0, 4
  %s20 = int_to_ptr.vmem [resolvable:$true] %s19
  %22 = dma.vmem_to_smem %s20, 16, [#allocation3], [#allocation2]
  %23 = dma.done [#allocation2], 16
  %24 = sfence
  $region1: #{tpu_custom_call.1} parent=0
    #allocation4 [shape = 'u8[4096]{0}', space=vmem, size = 0x1000, scoped, tag = 'output window, operand 0']
    #allocation5 [shape = 's32[2]{0}', space=sflag, size = 0x8, scoped, tag = 'scoped memory for tpu_custom_call.1']
    %25 = vsyncpa [#allocation5], 0
    %s26 = scalar_lea.sflag [#allocation5], 1
    %27 = vsyncpa %s26, 0
    loop: start=0, step=1, limit=4
    $region2: #{tpu_custom_call.1} parent=1 // loop_pre_header
      _
    $region3: #{tpu_custom_call.1} parent=1 // loop_header
      %s29 = sphi 0, %s33
      %p30 = scmp.ge.s32.totalorder %s29, 4
      %s39 = sphi 0, %s41
      %s42 = sphi 0, %s39
      %s43 = sphi 0, %s42
      %s59 = sphi 0, %s43
      %s63 = sphi 0, %s63
      %s65 = sphi 0, %s63
      %s66 = sphi 0, %s65
      %s80 = sphi 0, %s66
      %s84 = sphi 0, %s84
      %s86 = sphi 0, %s84
      %s87 = sphi 0, %s86
      %s101 = sphi 0, %s87
      %s105 = sphi 0, %s105
      %s107 = sphi 0, %s105
      %s108 = sphi 0, %s107
      %s122 = sphi 0, %s108
      %s126 = sphi 0, %s126
      %s128 = sphi 0, %s126
      %s129 = sphi 0, %s128
      %s143 = sphi 0, %s129
      %s147 = sphi 0, %s147
      %s149 = sphi 0, %s147
      %s150 = sphi 0, %s149
      %s164 = sphi 0, %s150
      %s168 = sphi 0, %s168
      %s170 = sphi 0, %s168
      %s171 = sphi 0, %s170
      %s185 = sphi 0, %s171
      %s189 = sphi 0, %s189
      %s191 = sphi 0, %s189
      %s192 = sphi 0, %s191
      %s206 = sphi 0, %s192
      %s210 = sphi 0, %s210
      %s212 = sphi 0, %s210
      %s213 = sphi 0, %s212
      %s227 = sphi 0, %s213
      %s231 = sphi 0, %s231
      %s233 = sphi 0, %s231
      %s234 = sphi 0, %s233
      %s248 = sphi 0, %s234
      %s252 = sphi 0, %s252
      %s254 = sphi 0, %s252
      %s255 = sphi 0, %s254
      %s269 = sphi 0, %s255
      %s273 = sphi 0, %s273
      %s275 = sphi 0, %s273
      %s276 = sphi 0, %s275
      %s290 = sphi 0, %s276
      %s294 = sphi 0, %s294
      %s296 = sphi 0, %s294
      %s297 = sphi 0, %s296
      %s311 = sphi 0, %s297
      %s317 = sphi 0, %s319
      %s320 = sphi 0, %s317
      %s321 = sphi 0, %s320
      %s337 = sphi 0, %s321
    $region4: #{tpu_custom_call.1} parent=1 // loop_header_branch
      %32 = sbr.rel (%p30) target = $region8
    $region5: #{tpu_custom_call.1} parent=1 // loop_body
      %s34 = ssub.s32 %s29, 1
      %s35 = ssub.s32 %s29, 2
      %s36 = sadd.s32 %s29, 1
      %s37 = ssub.s32 %s29, %s36
      %p38 = scmp.eq.s32.totalorder %s37, 0
      %s40 = sadd.s32 %s39, 1
      %s41 = scalar_select %p38, %s39, %s40
      %p44 = pneg %p38
      %p45 = scmp.eq.s32.totalorder %s29, 1
      %p46 = por %p44, %p45
      %p47 = scmp.ne.s32.totalorder %s39, %s42
      %p48 = scmp.eq.s32.totalorder %s29, 0
      %p49 = por %p47, %p48
      %p50 = scmp.ne.s32.totalorder %s39, %s42
      %p51 = scmp.eq.s32.totalorder %s34, 1
      %p52 = por %p50, %p51
      %p53 = scmp.ne.s32.totalorder %s42, %s43
      %p54 = scmp.eq.s32.totalorder %s34, 0
      %p55 = por %p53, %p54
      %p56 = scmp.ne.s32.totalorder %s42, %s43
      %p57 = scmp.eq.s32.totalorder %s35, 1
      %p58 = por %p56, %p57
      %p60 = scmp.ne.s32.totalorder %s43, %s59
      %p61 = scmp.eq.s32.totalorder %s35, 0
      %p62 = por %p60, %p61
      %s64 = sadd.s32 %s63, 1
      %p67 = scmp.eq.s32.totalorder %s29, 1
      %p68 = scmp.ne.s32.totalorder %s63, %s65
      %p69 = scmp.eq.s32.totalorder %s29, 0
      %p70 = por %p68, %p69
      %p71 = scmp.ne.s32.totalorder %s63, %s65
      %p72 = scmp.eq.s32.totalorder %s34, 1
      %p73 = por %p71, %p72
      %p74 = scmp.ne.s32.totalorder %s65, %s66
      %p75 = scmp.eq.s32.totalorder %s34, 0
      %p76 = por %p74, %p75
      %p77 = scmp.ne.s32.totalorder %s65, %s66
      %p78 = scmp.eq.s32.totalorder %s35, 1
      %p79 = por %p77, %p78
      %p81 = scmp.ne.s32.totalorder %s66, %s80
      %p82 = scmp.eq.s32.totalorder %s35, 0
      %p83 = por %p81, %p82
      %s85 = sadd.s32 %s84, 1
      %p88 = scmp.eq.s32.totalorder %s29, 1
      %p89 = scmp.ne.s32.totalorder %s84, %s86
      %p90 = scmp.eq.s32.totalorder %s29, 0
      %p91 = por %p89, %p90
      %p92 = scmp.ne.s32.totalorder %s84, %s86
      %p93 = scmp.eq.s32.totalorder %s34, 1
      %p94 = por %p92, %p93
      %p95 = scmp.ne.s32.totalorder %s86, %s87
      %p96 = scmp.eq.s32.totalorder %s34, 0
      %p97 = por %p95, %p96
      %p98 = scmp.ne.s32.totalorder %s86, %s87
      %p99 = scmp.eq.s32.totalorder %s35, 1
      %p100 = por %p98, %p99
      %p102 = scmp.ne.s32.totalorder %s87, %s101
      %p103 = scmp.eq.s32.totalorder %s35, 0
      %p104 = por %p102, %p103
      %s106 = sadd.s32 %s105, 1
      %p109 = scmp.eq.s32.totalorder %s29, 1
      %p110 = scmp.ne.s32.totalorder %s105, %s107
      %p111 = scmp.eq.s32.totalorder %s29, 0
      %p112 = por %p110, %p111
      %p113 = scmp.ne.s32.totalorder %s105, %s107
      %p114 = scmp.eq.s32.totalorder %s34, 1
      %p115 = por %p113, %p114
      %p116 = scmp.ne.s32.totalorder %s107, %s108
      %p117 = scmp.eq.s32.totalorder %s34, 0
      %p118 = por %p116, %p117
      %p119 = scmp.ne.s32.totalorder %s107, %s108
      %p120 = scmp.eq.s32.totalorder %s35, 1
      %p121 = por %p119, %p120
      %p123 = scmp.ne.s32.totalorder %s108, %s122
      %p124 = scmp.eq.s32.totalorder %s35, 0
      %p125 = por %p123, %p124
      %s127 = sadd.s32 %s126, 1
      %p130 = scmp.eq.s32.totalorder %s29, 1
      %p131 = scmp.ne.s32.totalorder %s126, %s128
      %p132 = scmp.eq.s32.totalorder %s29, 0
      %p133 = por %p131, %p132
      %p134 = scmp.ne.s32.totalorder %s126, %s128
      %p135 = scmp.eq.s32.totalorder %s34, 1
      %p136 = por %p134, %p135
      %p137 = scmp.ne.s32.totalorder %s128, %s129
      %p138 = scmp.eq.s32.totalorder %s34, 0
      %p139 = por %p137, %p138
      %p140 = scmp.ne.s32.totalorder %s128, %s129
      %p141 = scmp.eq.s32.totalorder %s35, 1
      %p142 = por %p140, %p141
      %p144 = scmp.ne.s32.totalorder %s129, %s143
      %p145 = scmp.eq.s32.totalorder %s35, 0
      %p146 = por %p144, %p145
      %s148 = sadd.s32 %s147, 1
      %p151 = scmp.eq.s32.totalorder %s29, 1
      %p152 = scmp.ne.s32.totalorder %s147, %s149
      %p153 = scmp.eq.s32.totalorder %s29, 0
      %p154 = por %p152, %p153
      %p155 = scmp.ne.s32.totalorder %s147, %s149
      %p156 = scmp.eq.s32.totalorder %s34, 1
      %p157 = por %p155, %p156
      %p158 = scmp.ne.s32.totalorder %s149, %s150
      %p159 = scmp.eq.s32.totalorder %s34, 0
      %p160 = por %p158, %p159
      %p161 = scmp.ne.s32.totalorder %s149, %s150
      %p162 = scmp.eq.s32.totalorder %s35, 1
      %p163 = por %p161, %p162
      %p165 = scmp.ne.s32.totalorder %s150, %s164
      %p166 = scmp.eq.s32.totalorder %s35, 0
      %p167 = por %p165, %p166
      %s169 = sadd.s32 %s168, 1
      %p172 = scmp.eq.s32.totalorder %s29, 1
      %p173 = scmp.ne.s32.totalorder %s168, %s170
      %p174 = scmp.eq.s32.totalorder %s29, 0
      %p175 = por %p173, %p174
      %p176 = scmp.ne.s32.totalorder %s168, %s170
      %p177 = scmp.eq.s32.totalorder %s34, 1
      %p178 = por %p176, %p177
      %p179 = scmp.ne.s32.totalorder %s170, %s171
      %p180 = scmp.eq.s32.totalorder %s34, 0
      %p181 = por %p179, %p180
      %p182 = scmp.ne.s32.totalorder %s170, %s171
      %p183 = scmp.eq.s32.totalorder %s35, 1
      %p184 = por %p182, %p183
      %p186 = scmp.ne.s32.totalorder %s171, %s185
      %p187 = scmp.eq.s32.totalorder %s35, 0
      %p188 = por %p186, %p187
      %s190 = sadd.s32 %s189, 1
      %p193 = scmp.eq.s32.totalorder %s29, 1
      %p194 = scmp.ne.s32.totalorder %s189, %s191
      %p195 = scmp.eq.s32.totalorder %s29, 0
      %p196 = por %p194, %p195
      %p197 = scmp.ne.s32.totalorder %s189, %s191
      %p198 = scmp.eq.s32.totalorder %s34, 1
      %p199 = por %p197, %p198
      %p200 = scmp.ne.s32.totalorder %s191, %s192
      %p201 = scmp.eq.s32.totalorder %s34, 0
      %p202 = por %p200, %p201
      %p203 = scmp.ne.s32.totalorder %s191, %s192
      %p204 = scmp.eq.s32.totalorder %s35, 1
      %p205 = por %p203, %p204
      %p207 = scmp.ne.s32.totalorder %s192, %s206
      %p208 = scmp.eq.s32.totalorder %s35, 0
      %p209 = por %p207, %p208
      %s211 = sadd.s32 %s210, 1
      %p214 = scmp.eq.s32.totalorder %s29, 1
      %p215 = scmp.ne.s32.totalorder %s210, %s212
      %p216 = scmp.eq.s32.totalorder %s29, 0
      %p217 = por %p215, %p216
      %p218 = scmp.ne.s32.totalorder %s210, %s212
      %p219 = scmp.eq.s32.totalorder %s34, 1
      %p220 = por %p218, %p219
      %p221 = scmp.ne.s32.totalorder %s212, %s213
      %p222 = scmp.eq.s32.totalorder %s34, 0
      %p223 = por %p221, %p222
      %p224 = scmp.ne.s32.totalorder %s212, %s213
      %p225 = scmp.eq.s32.totalorder %s35, 1
      %p226 = por %p224, %p225
      %p228 = scmp.ne.s32.totalorder %s213, %s227
      %p229 = scmp.eq.s32.totalorder %s35, 0
      %p230 = por %p228, %p229
      %s232 = sadd.s32 %s231, 1
      %p235 = scmp.eq.s32.totalorder %s29, 1
      %p236 = scmp.ne.s32.totalorder %s231, %s233
      %p237 = scmp.eq.s32.totalorder %s29, 0
      %p238 = por %p236, %p237
      %p239 = scmp.ne.s32.totalorder %s231, %s233
      %p240 = scmp.eq.s32.totalorder %s34, 1
      %p241 = por %p239, %p240
      %p242 = scmp.ne.s32.totalorder %s233, %s234
      %p243 = scmp.eq.s32.totalorder %s34, 0
      %p244 = por %p242, %p243
      %p245 = scmp.ne.s32.totalorder %s233, %s234
      %p246 = scmp.eq.s32.totalorder %s35, 1
      %p247 = por %p245, %p246
      %p249 = scmp.ne.s32.totalorder %s234, %s248
      %p250 = scmp.eq.s32.totalorder %s35, 0
      %p251 = por %p249, %p250
      %s253 = sadd.s32 %s252, 1
      %p256 = scmp.eq.s32.totalorder %s29, 1
      %p257 = scmp.ne.s32.totalorder %s252, %s254
      %p258 = scmp.eq.s32.totalorder %s29, 0
      %p259 = por %p257, %p258
      %p260 = scmp.ne.s32.totalorder %s252, %s254
      %p261 = scmp.eq.s32.totalorder %s34, 1
      %p262 = por %p260, %p261
      %p263 = scmp.ne.s32.totalorder %s254, %s255
      %p264 = scmp.eq.s32.totalorder %s34, 0
      %p265 = por %p263, %p264
      %p266 = scmp.ne.s32.totalorder %s254, %s255
      %p267 = scmp.eq.s32.totalorder %s35, 1
      %p268 = por %p266, %p267
      %p270 = scmp.ne.s32.totalorder %s255, %s269
      %p271 = scmp.eq.s32.totalorder %s35, 0
      %p272 = por %p270, %p271
      %s274 = sadd.s32 %s273, 1
      %p277 = scmp.eq.s32.totalorder %s29, 1
      %p278 = scmp.ne.s32.totalorder %s273, %s275
      %p279 = scmp.eq.s32.totalorder %s29, 0
      %p280 = por %p278, %p279
      %p281 = scmp.ne.s32.totalorder %s273, %s275
      %p282 = scmp.eq.s32.totalorder %s34, 1
      %p283 = por %p281, %p282
      %p284 = scmp.ne.s32.totalorder %s275, %s276
      %p285 = scmp.eq.s32.totalorder %s34, 0
      %p286 = por %p284, %p285
      %p287 = scmp.ne.s32.totalorder %s275, %s276
      %p288 = scmp.eq.s32.totalorder %s35, 1
      %p289 = por %p287, %p288
      %p291 = scmp.ne.s32.totalorder %s276, %s290
      %p292 = scmp.eq.s32.totalorder %s35, 0
      %p293 = por %p291, %p292
      %s295 = sadd.s32 %s294, 1
      %p298 = scmp.eq.s32.totalorder %s29, 1
      %p299 = scmp.ne.s32.totalorder %s294, %s296
      %p300 = scmp.eq.s32.totalorder %s29, 0
      %p301 = por %p299, %p300
      %p302 = scmp.ne.s32.totalorder %s294, %s296
      %p303 = scmp.eq.s32.totalorder %s34, 1
      %p304 = por %p302, %p303
      %p305 = scmp.ne.s32.totalorder %s296, %s297
      %p306 = scmp.eq.s32.totalorder %s34, 0
      %p307 = por %p305, %p306
      %p308 = scmp.ne.s32.totalorder %s296, %s297
      %p309 = scmp.eq.s32.totalorder %s35, 1
      %p310 = por %p308, %p309
      %p312 = scmp.ne.s32.totalorder %s297, %s311
      %p313 = scmp.eq.s32.totalorder %s35, 0
      %p314 = por %p312, %p313
      %s315 = ssub.s32 %s29, %s36
      %p316 = scmp.eq.s32.totalorder %s315, 0
      %s318 = sadd.s32 %s317, 1
      %s319 = scalar_select %p316, %s317, %s318
      %p322 = pneg %p316
      %p323 = scmp.eq.s32.totalorder %s29, 1
      %p324 = por %p322, %p323
      %p325 = scmp.ne.s32.totalorder %s317, %s320
      %p326 = scmp.eq.s32.totalorder %s29, 0
      %p327 = por %p325, %p326
      %p328 = scmp.ne.s32.totalorder %s317, %s320
      %p329 = scmp.eq.s32.totalorder %s34, 1
      %p330 = por %p328, %p329
      %p331 = scmp.ne.s32.totalorder %s320, %s321
      %p332 = scmp.eq.s32.totalorder %s34, 0
      %p333 = por %p331, %p332
      %p334 = scmp.ne.s32.totalorder %s320, %s321
      %p335 = scmp.eq.s32.totalorder %s35, 1
      %p336 = por %p334, %p335
      %p338 = scmp.ne.s32.totalorder %s321, %s337
      %p339 = scmp.eq.s32.totalorder %s35, 0
      %p340 = por %p338, %p339
      %p341 = scmp.le.s32.totalorder 1, %s29
      %p342 = scmp.lt.s32.totalorder %s29, 3
      %p343 = pnand %p341, %p342
      %p344 = pneg %p343
      // Predicated region
      $region9: #{tpu_custom_call.1} parent=5 // pred_check
        _
      $region10: #{tpu_custom_call.1} parent=5 // pred_check_branch
        %346 = sbr.rel (%p343) target = $region12
      $region11: #{tpu_custom_call.1} parent=5 // pred_region
        %s347 = ssub.s32 %s29, 1
        // Predicated region
        $region13: #{tpu_custom_call.1} parent=11 // pred_check
          %p348 = pneg %p76
        $region14: #{tpu_custom_call.1} parent=11 // pred_check_branch
          %350 = sbr.rel (%p348) target = $region16
        $region15: #{tpu_custom_call.1} parent=11 // pred_region
          _
        $region16: #{tpu_custom_call.1} parent=11 // pred_fallthru
          _
        // Predicated region
        $region17: #{tpu_custom_call.1} parent=11 // pred_check
          %p351 = pneg %p97
        $region18: #{tpu_custom_call.1} parent=11 // pred_check_branch
          %353 = sbr.rel (%p351) target = $region20
        $region19: #{tpu_custom_call.1} parent=11 // pred_region
          _
        $region20: #{tpu_custom_call.1} parent=11 // pred_fallthru
          _
        // Predicated region
        $region21: #{tpu_custom_call.1} parent=11 // pred_check
          %p354 = pneg %p118
        $region22: #{tpu_custom_call.1} parent=11 // pred_check_branch
          %356 = sbr.rel (%p354) target = $region24
        $region23: #{tpu_custom_call.1} parent=11 // pred_region
          _
        $region24: #{tpu_custom_call.1} parent=11 // pred_fallthru
          _
        // Predicated region
        $region25: #{tpu_custom_call.1} parent=11 // pred_check
          %p357 = pneg %p139
        $region26: #{tpu_custom_call.1} parent=11 // pred_check_branch
          %359 = sbr.rel (%p357) target = $region28
        $region27: #{tpu_custom_call.1} parent=11 // pred_region
          _
        $region28: #{tpu_custom_call.1} parent=11 // pred_fallthru
          _
        // Predicated region
        $region29: #{tpu_custom_call.1} parent=11 // pred_check
          %p360 = pneg %p160
        $region30: #{tpu_custom_call.1} parent=11 // pred_check_branch
          %362 = sbr.rel (%p360) target = $region32
        $region31: #{tpu_custom_call.1} parent=11 // pred_region
          _
        $region32: #{tpu_custom_call.1} parent=11 // pred_fallthru
          _
        // Predicated region
        $region33: #{tpu_custom_call.1} parent=11 // pred_check
          %p363 = pneg %p181
        $region34: #{tpu_custom_call.1} parent=11 // pred_check_branch
          %365 = sbr.rel (%p363) target = $region36
        $region35: #{tpu_custom_call.1} parent=11 // pred_region
          _
        $region36: #{tpu_custom_call.1} parent=11 // pred_fallthru
          _
        // Predicated region
        $region37: #{tpu_custom_call.1} parent=11 // pred_check
          %p366 = pneg %p202
        $region38: #{tpu_custom_call.1} parent=11 // pred_check_branch
          %368 = sbr.rel (%p366) target = $region40
        $region39: #{tpu_custom_call.1} parent=11 // pred_region
          _
        $region40: #{tpu_custom_call.1} parent=11 // pred_fallthru
          _
        // Predicated region
        $region41: #{tpu_custom_call.1} parent=11 // pred_check
          %p369 = pneg %p223
        $region42: #{tpu_custom_call.1} parent=11 // pred_check_branch
          %371 = sbr.rel (%p369) target = $region44
        $region43: #{tpu_custom_call.1} parent=11 // pred_region
          _
        $region44: #{tpu_custom_call.1} parent=11 // pred_fallthru
          _
        // Predicated region
        $region45: #{tpu_custom_call.1} parent=11 // pred_check
          %p372 = pneg %p244
        $region46: #{tpu_custom_call.1} parent=11 // pred_check_branch
          %374 = sbr.rel (%p372) target = $region48
        $region47: #{tpu_custom_call.1} parent=11 // pred_region
          _
        $region48: #{tpu_custom_call.1} parent=11 // pred_fallthru
          _
        // Predicated region
        $region49: #{tpu_custom_call.1} parent=11 // pred_check
          %p375 = pneg %p265
        $region50: #{tpu_custom_call.1} parent=11 // pred_check_branch
          %377 = sbr.rel (%p375) target = $region52
        $region51: #{tpu_custom_call.1} parent=11 // pred_region
          _
        $region52: #{tpu_custom_call.1} parent=11 // pred_fallthru
          _
        // Predicated region
        $region53: #{tpu_custom_call.1} parent=11 // pred_check
          %p378 = pneg %p286
        $region54: #{tpu_custom_call.1} parent=11 // pred_check_branch
          %380 = sbr.rel (%p378) target = $region56
        $region55: #{tpu_custom_call.1} parent=11 // pred_region
          _
        $region56: #{tpu_custom_call.1} parent=11 // pred_fallthru
          _
        // Predicated region
        $region57: #{tpu_custom_call.1} parent=11 // pred_check
          %p381 = pneg %p307
        $region58: #{tpu_custom_call.1} parent=11 // pred_check_branch
          %383 = sbr.rel (%p381) target = $region60
        $region59: #{tpu_custom_call.1} parent=11 // pred_region
          _
        $region60: #{tpu_custom_call.1} parent=11 // pred_fallthru
          _
      $region12: #{tpu_custom_call.1} parent=5 // pred_fallthru
        _
      %p384 = scmp.lt.s32.totalorder %s29, 2
      // Predicated region
      $region61: #{tpu_custom_call.1} parent=5 // pred_check
        %p385 = pneg %p384
      $region62: #{tpu_custom_call.1} parent=5 // pred_check_branch
        %387 = sbr.rel (%p385) target = $region64
      $region63: #{tpu_custom_call.1} parent=5 // pred_region
        // Predicated region
        $region65: #{tpu_custom_call.1} parent=63 // pred_check
          %p388 = pneg %p49
        $region66: #{tpu_custom_call.1} parent=63 // pred_check_branch
          %390 = sbr.rel (%p388) target = $region68
        $region67: #{tpu_custom_call.1} parent=63 // pred_region
          %p391 = scmp.lt.s32.totalorder %s29, 1
          %s392 = scalar_select %p391, %s29, 1
          %s393 = smul.addr %s392, 4
          %s394 = scalar_lea.vmem %s1, %s393
        $region68: #{tpu_custom_call.1} parent=63 // pred_fallthru
          _
      $region64: #{tpu_custom_call.1} parent=5 // pred_fallthru
        _
      %p395 = scmp.le.s32.totalorder 1, %s29
      %p396 = scmp.lt.s32.totalorder %s29, 3
      %p397 = pnand %p395, %p396
      %p398 = pneg %p397
      // Predicated region
      $region69: #{tpu_custom_call.1} parent=5 // pred_check
        _
      $region70: #{tpu_custom_call.1} parent=5 // pred_check_branch
        %400 = sbr.rel (%p397) target = $region72
      $region71: #{tpu_custom_call.1} parent=5 // pred_region
        %s401 = ssub.s32 %s29, 1
        %p402 = scmp.lt.s32.totalorder %s34, 1
        %s403 = scalar_select %p402, %s34, 1
        %s404 = smul.addr %s403, 4
        %s405 = scalar_lea.vmem %s1, %s404
        %p406 = pneg %p55
        %p407 = pneg %p52
        %p408 = pneg %p76
        %p409 = pneg %p73
        %p410 = pneg %p97
        %p411 = pneg %p94
        %p412 = pneg %p118
        %p413 = pneg %p115
        %p414 = pneg %p139
        %p415 = pneg %p136
        %p416 = pneg %p160
        %p417 = pneg %p157
        %p418 = pneg %p181
        %p419 = pneg %p178
        %p420 = pneg %p202
        %p421 = pneg %p199
        %p422 = pneg %p223
        %p423 = pneg %p220
        %p424 = pneg %p244
        %p425 = pneg %p241
        %p426 = pneg %p265
        %p427 = pneg %p262
        %p428 = pneg %p286
        %p429 = pneg %p283
        %p430 = pneg %p307
        %p431 = pneg %p304
        %p432 = pneg %p333
        %p433 = pneg %p330
        %s434 = sand.u32 %s320, 1
        %s435 = scalar_lea.sflag [#allocation5], %s434
        %s436 = sand.u32 %s320, 1
        %s437 = smul.addr %s436, 4
        %s438 = scalar_lea.vmem [#allocation4], %s437
        %p439 = scmp.lt.s32.totalorder %s34, 1
        %s440 = scalar_select %p439, %s34, 1
        %s441 = smul.addr %s440, 4
        %s442 = scalar_lea.vmem %s1, %s441
        %s444 = sld [smem:[#allocation3 + %s34]]
        %v445 = vld [vmem:[%s442] sm:$0xf]
        %v446 = vunpack.c.l.bf16 %v445
        %v447 = vld [vmem:[%s2] sm:$0x1]
        %v448 = vld [vmem:[%s3] sm:$0x1]
        %vm449 = vcmask 261120
        %v450 = vsel %vm449, %v446, 0.0
        %451 = vadd.xlane.f32.xlu0 %v450
        %v452 = vpop.xlane.xlu0 %451
        %v453 = vrcp.pop 32.0
        %v454 = vmul.f32 %v452, %v453
        %v455 = vsub.f32 %v446, %v454
        %v456 = vmul.f32 %v455, %v455
        %v457 = vsel %vm449, %v456, 0.0
        %458 = vadd.xlane.f32.xlu0 %v457
        %v459 = vpop.xlane.xlu0 %458
        %v460 = vrcp.pop 31.0
        %v461 = vmul.f32 %v459, %v460
        %v462 = vrsqrt.pop %v461
        %v463 = vmul.f32 %v461, %v462
        %vm464 = vcmp.eq.f32.partialorder %v461, inf
        %v465 = vsel %vm464, %v461, %v463
        %vm466 = vcmp.eq.f32.partialorder %v461, 0.0
        %v467 = vand.u32 %v461, 2147483648
        %v468 = vsel %vm466, %v467, %v465
        %v469 = vadd.f32 %v468, 1e-06
        %v470 = vrcp.pop %v469
        %v471 = vmul.f32 %v455, %v470
        %v473 = vlaneseq
        %v474 = vshrl.u32 %v473, 7
        %v475 = vsub.s32 0, %v474
        %v476 = vrot.slane %v447, %v475
        %v478 = vmul.f32 %v476, %v471
        %v480 = vlaneseq
        %v481 = vshrl.u32 %v480, 7
        %v482 = vsub.s32 0, %v481
        %v483 = vrot.slane %v448, %v482
        %v485 = vadd.f32 %v478, %v483
        %v486 = vpack.c.bf16 %v485, %v485
        %v487 = vld [vmem:[%s4] sm:$0xf]
        %v488 = vld [vmem:[%s4 + $0x4] sm:$0xf]
        %v489 = vld [vmem:[%s4 + $0x8] sm:$0xf]
        %v490 = vld [vmem:[%s4 + $0xc] sm:$0xf]
        %v491 = vld [vmem:[%s5] sm:$0x1]
        %v493 = vlaneseq
        %v494 = vshrl.u32 %v493, 7
        %v495 = vsub.s32 0, %v494
        %v496 = vrot.slane %v491, %v495
        %v502 = vunpack.c.l.b16 %v487
        %v503 = vunpack.c.l.b16 %v488
        %v504 = vunpack.c.l.b16 %v489
        %v505 = vunpack.c.l.b16 %v490
        %v506 = vpack.c.b16 %v503, %v502
        %v507 = vpack.c.b16 %v505, %v504
        %v511 = vsel %vm449, %v486, 0
        %513 = vmatprep.subr.bf16.mxu0 0
        %514 = vmatpush1.bf16.msra.mxu0 0
        %515 = vmatprep.subr.bf16.mxu0 0
        %516 = vmatpush1.bf16.msra.mxu0 0
        %517 = vmatprep.subr.bf16.mxu0 0
        %518 = vmatpush1.bf16.msra.mxu0 0
        %519 = vmatprep.subr.bf16.mxu0 0
        %520 = vmatpush1.bf16.msra.mxu0 0
        %521 = vmatprep.subr.bf16.mxu0 0
        %522 = vmatpush1.bf16.msra.mxu0 0
        %523 = vmatprep.subr.bf16.mxu0 0
        %524 = vmatpush1.bf16.msra.mxu0 0
        %525 = vmatprep.subr.bf16.mxu0 0
        %526 = vmatpush1.bf16.msra.mxu0 %v507
        %527 = vmatprep.subr.bf16.mxu0 0
        %528 = vmatpush1.bf16.msra.mxu0 %v506
        %529 = vmatprep.subr.bf16.mxu0 0
        %530 = vmatpush2.bf16.msra.mxu0 0
        %531 = vmatprep.subr.bf16.mxu0 0
        %532 = vmatpush2.bf16.msra.mxu0 0
        %533 = vmatprep.subr.bf16.mxu0 0
        %534 = vmatpush2.bf16.msra.mxu0 0
        %535 = vmatprep.subr.bf16.mxu0 0
        %536 = vmatpush2.bf16.msra.mxu0 0
        %537 = vmatprep.subr.bf16.mxu0 0
        %538 = vmatpush2.bf16.msra.mxu0 0
        %539 = vmatprep.subr.bf16.mxu0 0
        %540 = vmatpush2.bf16.msra.mxu0 0
        %541 = vmatprep.subr.bf16.mxu0 0
        %542 = vmatpush2.bf16.msra.mxu0 0
        %543 = vmatprep.subr.bf16.mxu0 0
        %544 = vmatpush2.bf16.msra.mxu0 0
        %545 = vmatprep.mubr.bf16.mxu0 0
        %546 = vmatmul.mubr.bf16.gmra.mxu0 %v511
        %v547 = vpop.f32.mrf.mxu0
        %v548 = vadd.f32 %v496, %v547
        %v549 = vpop.f32.mrf.mxu0
        %v550 = vpop.f32.mrf.mxu0
        %v551 = vpop.f32.mrf.mxu0
        %552 = vdwg.mxu0
        %v553 = vmul.f32 %v548, 0.35355338
        %v554 = vpack.c.bf16 %v553, %v553
        %v555 = vpack.c.bf16 %v548, %v548
        %557 = vrot.lane.b32.xlu0 %v554, 120
        %v558 = vpop.permute.xlu0 %557
        %559 = vrot.lane.b32.xlu0 %v554, 112
        %v560 = vpop.permute.xlu0 %559
        %561 = vrot.lane.b32.xlu0 %v554, 104
        %v562 = vpop.permute.xlu0 %561
        %564 = vrot.lane.b32.xlu0 %v555, 120
        %v565 = vpop.permute.xlu0 %564
        %566 = vrot.lane.b32.xlu0 %v555, 112
        %v567 = vpop.permute.xlu0 %566
        %568 = vrot.lane.b32.xlu0 %v555, 104
        %v569 = vpop.permute.xlu0 %568
        %570 = vrot.lane.b32.xlu0 %v555, 96
        %v571 = vpop.permute.xlu0 %570
        %vm572 = vcmask 64512
        %v574 = vsel %vm572, %v554, 0
        %v577 = vsel %vm572, %v571, 0
        %579 = vmatprep.subr.bf16.mxu0 0
        %580 = vmatpush1.bf16.xpose.msra.mxu0 0
        %581 = vmatprep.subr.bf16.mxu0 0
        %582 = vmatpush1.bf16.xpose.msra.mxu0 0
        %583 = vmatprep.subr.bf16.mxu0 0
        %584 = vmatpush1.bf16.xpose.msra.mxu0 0
        %585 = vmatprep.subr.bf16.mxu0 0
        %586 = vmatpush1.bf16.xpose.msra.mxu0 0
        %587 = vmatprep.subr.bf16.mxu0 0
        %588 = vmatpush1.bf16.xpose.msra.mxu0 0
        %589 = vmatprep.subr.bf16.mxu0 0
        %590 = vmatpush1.bf16.xpose.msra.mxu0 0
        %591 = vmatprep.subr.bf16.mxu0 0
        %592 = vmatpush1.bf16.xpose.msra.mxu0 0
        %593 = vmatprep.subr.bf16.mxu0 0
        %594 = vmatpush1.bf16.xpose.msra.mxu0 %v577
        %595 = vmatprep.subr.bf16.mxu0 0
        %596 = vmatpush2.bf16.xpose.msra.mxu0 0
        %597 = vmatprep.subr.bf16.mxu0 0
        %598 = vmatpush2.bf16.xpose.msra.mxu0 0
        %599 = vmatprep.subr.bf16.mxu0 0
        %600 = vmatpush2.bf16.xpose.msra.mxu0 0
        %601 = vmatprep.subr.bf16.mxu0 0
        %602 = vmatpush2.bf16.xpose.msra.mxu0 0
        %603 = vmatprep.subr.bf16.mxu0 0
        %604 = vmatpush2.bf16.xpose.msra.mxu0 0
        %605 = vmatprep.subr.bf16.mxu0 0
        %606 = vmatpush2.bf16.xpose.msra.mxu0 0
        %607 = vmatprep.subr.bf16.mxu0 0
        %608 = vmatpush2.bf16.xpose.msra.mxu0 0
        %609 = vmatprep.subr.bf16.mxu0 0
        %610 = vmatpush2.bf16.xpose.msra.mxu0 0
        %611 = vmatprep.mubr.bf16.mxu0 0
        %612 = vmatmul.mubr.bf16.gmra.mxu0 %v574
        %v613 = vpop.f32.mrf.mxu0
        %v614 = vadd.f32 0.0, %v613
        %v615 = vpop.f32.mrf.mxu0
        %v616 = vpop.f32.mrf.mxu0
        %v617 = vpop.f32.mrf.mxu0
        %618 = vdwg.mxu0
        %619 = vrot.lane.b32.xlu0 %v565, 96
        %v620 = vpop.permute.xlu0 %619
        %v622 = vsel %vm572, %v558, 0
        %v625 = vsel %vm572, %v620, 0
        %627 = vmatprep.subr.bf16.mxu0 0
        %628 = vmatpush1.bf16.xpose.msra.mxu0 0
        %629 = vmatprep.subr.bf16.mxu0 0
        %630 = vmatpush1.bf16.xpose.msra.mxu0 0
        %631 = vmatprep.subr.bf16.mxu0 0
        %632 = vmatpush1.bf16.xpose.msra.mxu0 0
        %633 = vmatprep.subr.bf16.mxu0 0
        %634 = vmatpush1.bf16.xpose.msra.mxu0 0
        %635 = vmatprep.subr.bf16.mxu0 0
        %636 = vmatpush1.bf16.xpose.msra.mxu0 0
        %637 = vmatprep.subr.bf16.mxu0 0
        %638 = vmatpush1.bf16.xpose.msra.mxu0 0
        %639 = vmatprep.subr.bf16.mxu0 0
        %640 = vmatpush1.bf16.xpose.msra.mxu0 0
        %641 = vmatprep.subr.bf16.mxu0 0
        %642 = vmatpush1.bf16.xpose.msra.mxu0 %v625
        %643 = vmatprep.subr.bf16.mxu0 0
        %644 = vmatpush2.bf16.xpose.msra.mxu0 0
        %645 = vmatprep.subr.bf16.mxu0 0
        %646 = vmatpush2.bf16.xpose.msra.mxu0 0
        %647 = vmatprep.subr.bf16.mxu0 0
        %648 = vmatpush2.bf16.xpose.msra.mxu0 0
        %649 = vmatprep.subr.bf16.mxu0 0
        %650 = vmatpush2.bf16.xpose.msra.mxu0 0
        %651 = vmatprep.subr.bf16.mxu0 0
        %652 = vmatpush2.bf16.xpose.msra.mxu0 0
        %653 = vmatprep.subr.bf16.mxu0 0
        %654 = vmatpush2.bf16.xpose.msra.mxu0 0
        %655 = vmatprep.subr.bf16.mxu0 0
        %656 = vmatpush2.bf16.xpose.msra.mxu0 0
        %657 = vmatprep.subr.bf16.mxu0 0
        %658 = vmatpush2.bf16.xpose.msra.mxu0 0
        %659 = vmatprep.mubr.bf16.mxu0 0
        %660 = vmatmul.mubr.bf16.gmra.mxu0 %v622
        %v661 = vpop.f32.mrf.mxu0
        %v662 = vadd.f32 0.0, %v661
        %v663 = vpop.f32.mrf.mxu0
        %v664 = vpop.f32.mrf.mxu0
        %v665 = vpop.f32.mrf.mxu0
        %666 = vdwg.mxu0
        %667 = vrot.lane.b32.xlu0 %v567, 96
        %v668 = vpop.permute.xlu0 %667
        %v670 = vsel %vm572, %v560, 0
        %v673 = vsel %vm572, %v668, 0
        %675 = vmatprep.subr.bf16.mxu0 0
        %676 = vmatpush1.bf16.xpose.msra.mxu0 0
        %677 = vmatprep.subr.bf16.mxu0 0
        %678 = vmatpush1.bf16.xpose.msra.mxu0 0
        %679 = vmatprep.subr.bf16.mxu0 0
        %680 = vmatpush1.bf16.xpose.msra.mxu0 0
        %681 = vmatprep.subr.bf16.mxu0 0
        %682 = vmatpush1.bf16.xpose.msra.mxu0 0
        %683 = vmatprep.subr.bf16.mxu0 0
        %684 = vmatpush1.bf16.xpose.msra.mxu0 0
        %685 = vmatprep.subr.bf16.mxu0 0
        %686 = vmatpush1.bf16.xpose.msra.mxu0 0
        %687 = vmatprep.subr.bf16.mxu0 0
        %688 = vmatpush1.bf16.xpose.msra.mxu0 0
        %689 = vmatprep.subr.bf16.mxu0 0
        %690 = vmatpush1.bf16.xpose.msra.mxu0 %v673
        %691 = vmatprep.subr.bf16.mxu0 0
        %692 = vmatpush2.bf16.xpose.msra.mxu0 0
        %693 = vmatprep.subr.bf16.mxu0 0
        %694 = vmatpush2.bf16.xpose.msra.mxu0 0
        %695 = vmatprep.subr.bf16.mxu0 0
        %696 = vmatpush2.bf16.xpose.msra.mxu0 0
        %697 = vmatprep.subr.bf16.mxu0 0
        %698 = vmatpush2.bf16.xpose.msra.mxu0 0
        %699 = vmatprep.subr.bf16.mxu0 0
        %700 = vmatpush2.bf16.xpose.msra.mxu0 0
        %701 = vmatprep.subr.bf16.mxu0 0
        %702 = vmatpush2.bf16.xpose.msra.mxu0 0
        %703 = vmatprep.subr.bf16.mxu0 0
        %704 = vmatpush2.bf16.xpose.msra.mxu0 0
        %705 = vmatprep.subr.bf16.mxu0 0
        %706 = vmatpush2.bf16.xpose.msra.mxu0 0
        %707 = vmatprep.mubr.bf16.mxu0 0
        %708 = vmatmul.mubr.bf16.gmra.mxu0 %v670
        %v709 = vpop.f32.mrf.mxu0
        %v710 = vadd.f32 0.0, %v709
        %v711 = vpop.f32.mrf.mxu0
        %v712 = vpop.f32.mrf.mxu0
        %v713 = vpop.f32.mrf.mxu0
        %714 = vdwg.mxu0
        %715 = vrot.lane.b32.xlu0 %v569, 96
        %v716 = vpop.permute.xlu0 %715
        %v718 = vsel %vm572, %v562, 0
        %v721 = vsel %vm572, %v716, 0
        %723 = vmatprep.subr.bf16.mxu0 0
        %724 = vmatpush1.bf16.xpose.msra.mxu0 0
        %725 = vmatprep.subr.bf16.mxu0 0
        %726 = vmatpush1.bf16.xpose.msra.mxu0 0
        %727 = vmatprep.subr.bf16.mxu0 0
        %728 = vmatpush1.bf16.xpose.msra.mxu0 0
        %729 = vmatprep.subr.bf16.mxu0 0
        %730 = vmatpush1.bf16.xpose.msra.mxu0 0
        %731 = vmatprep.subr.bf16.mxu0 0
        %732 = vmatpush1.bf16.xpose.msra.mxu0 0
        %733 = vmatprep.subr.bf16.mxu0 0
        %734 = vmatpush1.bf16.xpose.msra.mxu0 0
        %735 = vmatprep.subr.bf16.mxu0 0
        %736 = vmatpush1.bf16.xpose.msra.mxu0 0
        %737 = vmatprep.subr.bf16.mxu0 0
        %738 = vmatpush1.bf16.xpose.msra.mxu0 %v721
        %739 = vmatprep.subr.bf16.mxu0 0
        %740 = vmatpush2.bf16.xpose.msra.mxu0 0
        %741 = vmatprep.subr.bf16.mxu0 0
        %742 = vmatpush2.bf16.xpose.msra.mxu0 0
        %743 = vmatprep.subr.bf16.mxu0 0
        %744 = vmatpush2.bf16.xpose.msra.mxu0 0
        %745 = vmatprep.subr.bf16.mxu0 0
        %746 = vmatpush2.bf16.xpose.msra.mxu0 0
        %747 = vmatprep.subr.bf16.mxu0 0
        %748 = vmatpush2.bf16.xpose.msra.mxu0 0
        %749 = vmatprep.subr.bf16.mxu0 0
        %750 = vmatpush2.bf16.xpose.msra.mxu0 0
        %751 = vmatprep.subr.bf16.mxu0 0
        %752 = vmatpush2.bf16.xpose.msra.mxu0 0
        %753 = vmatprep.subr.bf16.mxu0 0
        %754 = vmatpush2.bf16.xpose.msra.mxu0 0
        %755 = vmatprep.mubr.bf16.mxu0 0
        %756 = vmatmul.mubr.bf16.gmra.mxu0 %v718
        %v757 = vpop.f32.mrf.mxu0
        %v758 = vadd.f32 0.0, %v757
        %v759 = vpop.f32.mrf.mxu0
        %v760 = vpop.f32.mrf.mxu0
        %v761 = vpop.f32.mrf.mxu0
        %762 = vdwg.mxu0
        %v763 = vlaneseq
        %v764 = vand.u32 %v763, 127
        %v765 = vstv %s444
        %vm766 = vcmp.lt.s32.totalorder %v764, %v765
        %v767 = vsel %vm766, 1, 0
        %vm768 = vcmp.eq.s32.totalorder %v767, 1
        %v769 = vsel %vm768, %v614, -1e+09
        %v770 = vsel %vm768, %v662, -1e+09
        %v771 = vsel %vm768, %v710, -1e+09
        %v772 = vsel %vm768, %v758, -1e+09
        %v773 = vsel %vm572, %v769, -inf
        %774 = vmax.xlane.f32.xlu0 %v773
        %v775 = vpop.xlane.xlu0 %774
        %v776 = vsel %vm572, %v770, -inf
        %777 = vmax.xlane.f32.xlu0 %v776
        %v778 = vpop.xlane.xlu0 %777
        %v779 = vsel %vm572, %v771, -inf
        %780 = vmax.xlane.f32.xlu0 %v779
        %v781 = vpop.xlane.xlu0 %780
        %v782 = vsel %vm572, %v772, -inf
        %783 = vmax.xlane.f32.xlu0 %v782
        %v784 = vpop.xlane.xlu0 %783
        %v785 = vsub.f32 %v769, %v775
        %v786 = vsub.f32 %v770, %v778
        %v787 = vsub.f32 %v771, %v781
        %v788 = vsub.f32 %v772, %v784
        %v789 = vmul.f32 %v785, 1.442695
        %v790 = vpow.pop %v789
        %v791 = vmul.f32 %v786, 1.442695
        %v792 = vpow.pop %v791
        %v793 = vmul.f32 %v787, 1.442695
        %v794 = vpow.pop %v793
        %v795 = vmul.f32 %v788, 1.442695
        %v796 = vpow.pop %v795
        %v797 = vsel %vm572, %v790, 0.0
        %798 = vadd.xlane.f32.xlu0 %v797
        %v799 = vpop.xlane.xlu0 %798
        %v800 = vsel %vm572, %v792, 0.0
        %801 = vadd.xlane.f32.xlu0 %v800
        %v802 = vpop.xlane.xlu0 %801
        %v803 = vsel %vm572, %v794, 0.0
        %804 = vadd.xlane.f32.xlu0 %v803
        %v805 = vpop.xlane.xlu0 %804
        %v806 = vsel %vm572, %v796, 0.0
        %807 = vadd.xlane.f32.xlu0 %v806
        %v808 = vpop.xlane.xlu0 %807
        %v809 = vrcp.pop %v799
        %v810 = vrcp.pop %v802
        %v811 = vrcp.pop %v805
        %v812 = vrcp.pop %v808
        %v813 = vmul.f32 %v790, %v809
        %v814 = vmul.f32 %v792, %v810
        %v815 = vmul.f32 %v794, %v811
        %v816 = vmul.f32 %v796, %v812
        %v817 = vpack.c.bf16 %v813, %v813
        %v818 = vpack.c.bf16 %v814, %v814
        %v819 = vpack.c.bf16 %v815, %v815
        %v820 = vpack.c.bf16 %v816, %v816
        %821 = vrot.lane.b32.xlu0 %v555, 64
        %v822 = vpop.permute.xlu0 %821
        %v824 = vsel %vm572, %v817, 0
        %vm826 = vcmask 1043456
        %v828 = vsel %vm826, %v822, 0
        %830 = vmatprep.subr.bf16.mxu0 0
        %831 = vmatpush1.bf16.msra.mxu0 0
        %832 = vmatprep.subr.bf16.mxu0 0
        %833 = vmatpush1.bf16.msra.mxu0 0
        %834 = vmatprep.subr.bf16.mxu0 0
        %835 = vmatpush1.bf16.msra.mxu0 0
        %836 = vmatprep.subr.bf16.mxu0 0
        %837 = vmatpush1.bf16.msra.mxu0 0
        %838 = vmatprep.subr.bf16.mxu0 0
        %839 = vmatpush1.bf16.msra.mxu0 0
        %840 = vmatprep.subr.bf16.mxu0 0
        %841 = vmatpush1.bf16.msra.mxu0 0
        %842 = vmatprep.subr.bf16.mxu0 0
        %843 = vmatpush1.bf16.msra.mxu0 0
        %844 = vmatprep.subr.bf16.mxu0 0
        %845 = vmatpush1.bf16.msra.mxu0 %v828
        %846 = vmatprep.subr.bf16.mxu0 0
        %847 = vmatpush2.bf16.msra.mxu0 0
        %848 = vmatprep.subr.bf16.mxu0 0
        %849 = vmatpush2.bf16.msra.mxu0 0
        %850 = vmatprep.subr.bf16.mxu0 0
        %851 = vmatpush2.bf16.msra.mxu0 0
        %852 = vmatprep.subr.bf16.mxu0 0
        %853 = vmatpush2.bf16.msra.mxu0 0
        %854 = vmatprep.subr.bf16.mxu0 0
        %855 = vmatpush2.bf16.msra.mxu0 0
        %856 = vmatprep.subr.bf16.mxu0 0
        %857 = vmatpush2.bf16.msra.mxu0 0
        %858 = vmatprep.subr.bf16.mxu0 0
        %859 = vmatpush2.bf16.msra.mxu0 0
        %860 = vmatprep.subr.bf16.mxu0 0
        %861 = vmatpush2.bf16.msra.mxu0 0
        %862 = vmatprep.mubr.bf16.mxu0 0
        %863 = vmatmul.mubr.bf16.gmra.mxu0 %v824
        %v864 = vpop.f32.mrf.mxu0
        %v865 = vadd.f32 0.0, %v864
        %v866 = vpop.f32.mrf.mxu0
        %v867 = vpop.f32.mrf.mxu0
        %v868 = vpop.f32.mrf.mxu0
        %869 = vdwg.mxu0
        %870 = vrot.lane.b32.xlu0 %v565, 64
        %v871 = vpop.permute.xlu0 %870
        %v873 = vsel %vm572, %v818, 0
        %v876 = vsel %vm826, %v871, 0
        %878 = vmatprep.subr.bf16.mxu0 0
        %879 = vmatpush1.bf16.msra.mxu0 0
        %880 = vmatprep.subr.bf16.mxu0 0
        %881 = vmatpush1.bf16.msra.mxu0 0
        %882 = vmatprep.subr.bf16.mxu0 0
        %883 = vmatpush1.bf16.msra.mxu0 0
        %884 = vmatprep.subr.bf16.mxu0 0
        %885 = vmatpush1.bf16.msra.mxu0 0
        %886 = vmatprep.subr.bf16.mxu0 0
        %887 = vmatpush1.bf16.msra.mxu0 0
        %888 = vmatprep.subr.bf16.mxu0 0
        %889 = vmatpush1.bf16.msra.mxu0 0
        %890 = vmatprep.subr.bf16.mxu0 0
        %891 = vmatpush1.bf16.msra.mxu0 0
        %892 = vmatprep.subr.bf16.mxu0 0
        %893 = vmatpush1.bf16.msra.mxu0 %v876
        %894 = vmatprep.subr.bf16.mxu0 0
        %895 = vmatpush2.bf16.msra.mxu0 0
        %896 = vmatprep.subr.bf16.mxu0 0
        %897 = vmatpush2.bf16.msra.mxu0 0
        %898 = vmatprep.subr.bf16.mxu0 0
        %899 = vmatpush2.bf16.msra.mxu0 0
        %900 = vmatprep.subr.bf16.mxu0 0
        %901 = vmatpush2.bf16.msra.mxu0 0
        %902 = vmatprep.subr.bf16.mxu0 0
        %903 = vmatpush2.bf16.msra.mxu0 0
        %904 = vmatprep.subr.bf16.mxu0 0
        %905 = vmatpush2.bf16.msra.mxu0 0
        %906 = vmatprep.subr.bf16.mxu0 0
        %907 = vmatpush2.bf16.msra.mxu0 0
        %908 = vmatprep.subr.bf16.mxu0 0
        %909 = vmatpush2.bf16.msra.mxu0 0
        %910 = vmatprep.mubr.bf16.mxu0 0
        %911 = vmatmul.mubr.bf16.gmra.mxu0 %v873
        %v912 = vpop.f32.mrf.mxu0
        %v913 = vadd.f32 0.0, %v912
        %v914 = vpop.f32.mrf.mxu0
        %v915 = vpop.f32.mrf.mxu0
        %v916 = vpop.f32.mrf.mxu0
        %917 = vdwg.mxu0
        %918 = vrot.lane.b32.xlu0 %v567, 64
        %v919 = vpop.permute.xlu0 %918
        %v921 = vsel %vm572, %v819, 0
        %v924 = vsel %vm826, %v919, 0
        %926 = vmatprep.subr.bf16.mxu0 0
        %927 = vmatpush1.bf16.msra.mxu0 0
        %928 = vmatprep.subr.bf16.mxu0 0
        %929 = vmatpush1.bf16.msra.mxu0 0
        %930 = vmatprep.subr.bf16.mxu0 0
        %931 = vmatpush1.bf16.msra.mxu0 0
        %932 = vmatprep.subr.bf16.mxu0 0
        %933 = vmatpush1.bf16.msra.mxu0 0
        %934 = vmatprep.subr.bf16.mxu0 0
        %935 = vmatpush1.bf16.msra.mxu0 0
        %936 = vmatprep.subr.bf16.mxu0 0
        %937 = vmatpush1.bf16.msra.mxu0 0
        %938 = vmatprep.subr.bf16.mxu0 0
        %939 = vmatpush1.bf16.msra.mxu0 0
        %940 = vmatprep.subr.bf16.mxu0 0
        %941 = vmatpush1.bf16.msra.mxu0 %v924
        %942 = vmatprep.subr.bf16.mxu0 0
        %943 = vmatpush2.bf16.msra.mxu0 0
        %944 = vmatprep.subr.bf16.mxu0 0
        %945 = vmatpush2.bf16.msra.mxu0 0
        %946 = vmatprep.subr.bf16.mxu0 0
        %947 = vmatpush2.bf16.msra.mxu0 0
        %948 = vmatprep.subr.bf16.mxu0 0
        %949 = vmatpush2.bf16.msra.mxu0 0
        %950 = vmatprep.subr.bf16.mxu0 0
        %951 = vmatpush2.bf16.msra.mxu0 0
        %952 = vmatprep.subr.bf16.mxu0 0
        %953 = vmatpush2.bf16.msra.mxu0 0
        %954 = vmatprep.subr.bf16.mxu0 0
        %955 = vmatpush2.bf16.msra.mxu0 0
        %956 = vmatprep.subr.bf16.mxu0 0
        %957 = vmatpush2.bf16.msra.mxu0 0
        %958 = vmatprep.mubr.bf16.mxu0 0
        %959 = vmatmul.mubr.bf16.gmra.mxu0 %v921
        %v960 = vpop.f32.mrf.mxu0
        %v961 = vadd.f32 0.0, %v960
        %v962 = vpop.f32.mrf.mxu0
        %v963 = vpop.f32.mrf.mxu0
        %v964 = vpop.f32.mrf.mxu0
        %965 = vdwg.mxu0
        %966 = vrot.lane.b32.xlu0 %v569, 64
        %v967 = vpop.permute.xlu0 %966
        %v969 = vsel %vm572, %v820, 0
        %v972 = vsel %vm826, %v967, 0
        %974 = vmatprep.subr.bf16.mxu0 0
        %975 = vmatpush1.bf16.msra.mxu0 0
        %976 = vmatprep.subr.bf16.mxu0 0
        %977 = vmatpush1.bf16.msra.mxu0 0
        %978 = vmatprep.subr.bf16.mxu0 0
        %979 = vmatpush1.bf16.msra.mxu0 0
        %980 = vmatprep.subr.bf16.mxu0 0
        %981 = vmatpush1.bf16.msra.mxu0 0
        %982 = vmatprep.subr.bf16.mxu0 0
        %983 = vmatpush1.bf16.msra.mxu0 0
        %984 = vmatprep.subr.bf16.mxu0 0
        %985 = vmatpush1.bf16.msra.mxu0 0
        %986 = vmatprep.subr.bf16.mxu0 0
        %987 = vmatpush1.bf16.msra.mxu0 0
        %988 = vmatprep.subr.bf16.mxu0 0
        %989 = vmatpush1.bf16.msra.mxu0 %v972
        %990 = vmatprep.subr.bf16.mxu0 0
        %991 = vmatpush2.bf16.msra.mxu0 0
        %992 = vmatprep.subr.bf16.mxu0 0
        %993 = vmatpush2.bf16.msra.mxu0 0
        %994 = vmatprep.subr.bf16.mxu0 0
        %995 = vmatpush2.bf16.msra.mxu0 0
        %996 = vmatprep.subr.bf16.mxu0 0
        %997 = vmatpush2.bf16.msra.mxu0 0
        %998 = vmatprep.subr.bf16.mxu0 0
        %999 = vmatpush2.bf16.msra.mxu0 0
        %1000 = vmatprep.subr.bf16.mxu0 0
        %1001 = vmatpush2.bf16.msra.mxu0 0
        %1002 = vmatprep.subr.bf16.mxu0 0
        %1003 = vmatpush2.bf16.msra.mxu0 0
        %1004 = vmatprep.subr.bf16.mxu0 0
        %1005 = vmatpush2.bf16.msra.mxu0 0
        %1006 = vmatprep.mubr.bf16.mxu0 0
        %1007 = vmatmul.mubr.bf16.gmra.mxu0 %v969
        %v1008 = vpop.f32.mrf.mxu0
        %v1009 = vadd.f32 0.0, %v1008
        %v1010 = vpop.f32.mrf.mxu0
        %v1011 = vpop.f32.mrf.mxu0
        %v1012 = vpop.f32.mrf.mxu0
        %1013 = vdwg.mxu0
        %1015 = vrot.lane.b32.xlu0 %v913, 8
        %v1016 = vpop.permute.xlu0 %1015
        %1019 = vrot.lane.b32.xlu0 %v961, 16
        %v1020 = vpop.permute.xlu0 %1019
        %1023 = vrot.lane.b32.xlu0 %v1009, 24
        %v1024 = vpop.permute.xlu0 %1023
        %v1026 = vsel %vm572, %v865, %v1016
        %vm1027 = vcmask 130048
        %v1028 = vsel %vm1027, %v1026, %v1020
        %vm1029 = vcmask 195584
        %v1030 = vsel %vm1029, %v1028, %v1024
        %v1031 = vpack.c.bf16 %v1030, %v1030
        %v1032 = vld [vmem:[%s6] sm:$0xf]
        %v1033 = vld [vmem:[%s6 + $0x4] sm:$0xf]
        %v1034 = vld [vmem:[%s6 + $0x8] sm:$0xf]
        %v1035 = vld [vmem:[%s6 + $0xc] sm:$0xf]
        %v1036 = vld [vmem:[%s7] sm:$0x1]
        %v1038 = vlaneseq
        %v1039 = vshrl.u32 %v1038, 7
        %v1040 = vsub.s32 0, %v1039
        %v1041 = vrot.slane %v1036, %v1040
        %v1047 = vunpack.c.l.b16 %v1032
        %v1048 = vunpack.c.l.b16 %v1033
        %v1049 = vunpack.c.l.b16 %v1034
        %v1050 = vunpack.c.l.b16 %v1035
        %v1051 = vpack.c.b16 %v1048, %v1047
        %v1052 = vpack.c.b16 %v1050, %v1049
        %v1056 = vsel %vm449, %v1031, 0
        %1058 = vmatprep.subr.bf16.mxu0 0
        %1059 = vmatpush1.bf16.msra.mxu0 0
        %1060 = vmatprep.subr.bf16.mxu0 0
        %1061 = vmatpush1.bf16.msra.mxu0 0
        %1062 = vmatprep.subr.bf16.mxu0 0
        %1063 = vmatpush1.bf16.msra.mxu0 0
        %1064 = vmatprep.subr.bf16.mxu0 0
        %1065 = vmatpush1.bf16.msra.mxu0 0
        %1066 = vmatprep.subr.bf16.mxu0 0
        %1067 = vmatpush1.bf16.msra.mxu0 0
        %1068 = vmatprep.subr.bf16.mxu0 0
        %1069 = vmatpush1.bf16.msra.mxu0 0
        %1070 = vmatprep.subr.bf16.mxu0 0
        %1071 = vmatpush1.bf16.msra.mxu0 %v1052
        %1072 = vmatprep.subr.bf16.mxu0 0
        %1073 = vmatpush1.bf16.msra.mxu0 %v1051
        %1074 = vmatprep.subr.bf16.mxu0 0
        %1075 = vmatpush2.bf16.msra.mxu0 0
        %1076 = vmatprep.subr.bf16.mxu0 0
        %1077 = vmatpush2.bf16.msra.mxu0 0
        %1078 = vmatprep.subr.bf16.mxu0 0
        %1079 = vmatpush2.bf16.msra.mxu0 0
        %1080 = vmatprep.subr.bf16.mxu0 0
        %1081 = vmatpush2.bf16.msra.mxu0 0
        %1082 = vmatprep.subr.bf16.mxu0 0
        %1083 = vmatpush2.bf16.msra.mxu0 0
        %1084 = vmatprep.subr.bf16.mxu0 0
        %1085 = vmatpush2.bf16.msra.mxu0 0
        %1086 = vmatprep.subr.bf16.mxu0 0
        %1087 = vmatpush2.bf16.msra.mxu0 0
        %1088 = vmatprep.subr.bf16.mxu0 0
        %1089 = vmatpush2.bf16.msra.mxu0 0
        %1090 = vmatprep.mubr.bf16.mxu0 0
        %1091 = vmatmul.mubr.bf16.gmra.mxu0 %v1056
        %v1092 = vpop.f32.mrf.mxu0
        %v1093 = vadd.f32 %v1041, %v1092
        %v1094 = vpop.f32.mrf.mxu0
        %v1095 = vpop.f32.mrf.mxu0
        %v1096 = vpop.f32.mrf.mxu0
        %1097 = vdwg.mxu0
        %v1098 = vadd.f32 %v446, %v1093
        %v1099 = vld [vmem:[%s8] sm:$0x1]
        %v1100 = vld [vmem:[%s9] sm:$0x1]
        %v1101 = vsel %vm449, %v1098, 0.0
        %1102 = vadd.xlane.f32.xlu0 %v1101
        %v1103 = vpop.xlane.xlu0 %1102
        %v1104 = vmul.f32 %v1103, %v453
        %v1105 = vsub.f32 %v1098, %v1104
        %v1106 = vmul.f32 %v1105, %v1105
        %v1107 = vsel %vm449, %v1106, 0.0
        %1108 = vadd.xlane.f32.xlu0 %v1107
        %v1109 = vpop.xlane.xlu0 %1108
        %v1110 = vmul.f32 %v1109, %v460
        %v1111 = vrsqrt.pop %v1110
        %v1112 = vmul.f32 %v1110, %v1111
        %vm1113 = vcmp.eq.f32.partialorder %v1110, inf
        %v1114 = vsel %vm1113, %v1110, %v1112
        %vm1115 = vcmp.eq.f32.partialorder %v1110, 0.0
        %v1116 = vand.u32 %v1110, 2147483648
        %v1117 = vsel %vm1115, %v1116, %v1114
        %v1118 = vadd.f32 %v1117, 1e-06
        %v1119 = vrcp.pop %v1118
        %v1120 = vmul.f32 %v1105, %v1119
        %v1122 = vlaneseq
        %v1123 = vshrl.u32 %v1122, 7
        %v1124 = vsub.s32 0, %v1123
        %v1125 = vrot.slane %v1099, %v1124
        %v1127 = vmul.f32 %v1125, %v1120
        %v1129 = vlaneseq
        %v1130 = vshrl.u32 %v1129, 7
        %v1131 = vsub.s32 0, %v1130
        %v1132 = vrot.slane %v1100, %v1131
        %v1134 = vadd.f32 %v1127, %v1132
        %v1135 = vpack.c.bf16 %v1134, %v1134
        %v1136 = vld [vmem:[%s10] sm:$0xf]
        %v1137 = vld [vmem:[%s10 + $0x4] sm:$0xf]
        %v1138 = vld [vmem:[%s10 + $0x8] sm:$0xf]
        %v1139 = vld [vmem:[%s10 + $0xc] sm:$0xf]
        %v1140 = vld [vmem:[%s11] sm:$0x1]
        %v1142 = vlaneseq
        %v1143 = vshrl.u32 %v1142, 7
        %v1144 = vsub.s32 0, %v1143
        %v1145 = vrot.slane %v1140, %v1144
        %v1151 = vunpack.c.l.b16 %v1136
        %v1152 = vunpack.c.l.b16 %v1137
        %v1153 = vunpack.c.l.b16 %v1138
        %v1154 = vunpack.c.l.b16 %v1139
        %v1155 = vpack.c.b16 %v1152, %v1151
        %v1156 = vpack.c.b16 %v1154, %v1153
        %v1160 = vsel %vm449, %v1135, 0
        %1162 = vmatprep.subr.bf16.mxu0 0
        %1163 = vmatpush1.bf16.msra.mxu0 0
        %1164 = vmatprep.subr.bf16.mxu0 0
        %1165 = vmatpush1.bf16.msra.mxu0 0
        %1166 = vmatprep.subr.bf16.mxu0 0
        %1167 = vmatpush1.bf16.msra.mxu0 0
        %1168 = vmatprep.subr.bf16.mxu0 0
        %1169 = vmatpush1.bf16.msra.mxu0 0
        %1170 = vmatprep.subr.bf16.mxu0 0
        %1171 = vmatpush1.bf16.msra.mxu0 0
        %1172 = vmatprep.subr.bf16.mxu0 0
        %1173 = vmatpush1.bf16.msra.mxu0 0
        %1174 = vmatprep.subr.bf16.mxu0 0
        %1175 = vmatpush1.bf16.msra.mxu0 %v1156
        %1176 = vmatprep.subr.bf16.mxu0 0
        %1177 = vmatpush1.bf16.msra.mxu0 %v1155
        %1178 = vmatprep.subr.bf16.mxu0 0
        %1179 = vmatpush2.bf16.msra.mxu0 0
        %1180 = vmatprep.subr.bf16.mxu0 0
        %1181 = vmatpush2.bf16.msra.mxu0 0
        %1182 = vmatprep.subr.bf16.mxu0 0
        %1183 = vmatpush2.bf16.msra.mxu0 0
        %1184 = vmatprep.subr.bf16.mxu0 0
        %1185 = vmatpush2.bf16.msra.mxu0 0
        %1186 = vmatprep.subr.bf16.mxu0 0
        %1187 = vmatpush2.bf16.msra.mxu0 0
        %1188 = vmatprep.subr.bf16.mxu0 0
        %1189 = vmatpush2.bf16.msra.mxu0 0
        %1190 = vmatprep.subr.bf16.mxu0 0
        %1191 = vmatpush2.bf16.msra.mxu0 0
        %1192 = vmatprep.subr.bf16.mxu0 0
        %1193 = vmatpush2.bf16.msra.mxu0 0
        %1194 = vmatprep.mubr.bf16.mxu0 0
        %1195 = vmatmul.mubr.bf16.gmra.mxu0 %v1160
        %v1196 = vpop.f32.mrf.mxu0
        %v1197 = vadd.f32 %v1145, %v1196
        %v1198 = vpop.f32.mrf.mxu0
        %v1199 = vpop.f32.mrf.mxu0
        %v1200 = vpop.f32.mrf.mxu0
        %1201 = vdwg.mxu0
        %v1202 = vmul.f32 %v1197, 0.5
        %v1203 = vmul.f32 %v1197, 0.044715
        %v1204 = vmul.f32 %v1203, %v1197
        %v1205 = vmul.f32 %v1204, %v1197
        %v1206 = vadd.f32 %v1197, %v1205
        %v1207 = vmul.f32 %v1206, 0.7978846
        %v1208 = vtanh.pop %v1207
        %v1209 = vadd.f32 %v1208, 1.0
        %v1210 = vmul.f32 %v1202, %v1209
        %v1211 = vpack.c.bf16 %v1210, %v1210
        %v1212 = vld [vmem:[%s12] sm:$0xf]
        %v1213 = vld [vmem:[%s12 + $0x4] sm:$0xf]
        %v1214 = vld [vmem:[%s12 + $0x8] sm:$0xf]
        %v1215 = vld [vmem:[%s12 + $0xc] sm:$0xf]
        %v1216 = vld [vmem:[%s12 + $0x10] sm:$0xf]
        %v1217 = vld [vmem:[%s12 + $0x14] sm:$0xf]
        %v1218 = vld [vmem:[%s12 + $0x18] sm:$0xf]
        %v1219 = vld [vmem:[%s12 + $0x1c] sm:$0xf]
        %v1220 = vld [vmem:[%s12 + $0x20] sm:$0xf]
        %v1221 = vld [vmem:[%s12 + $0x24] sm:$0xf]
        %v1222 = vld [vmem:[%s12 + $0x28] sm:$0xf]
        %v1223 = vld [vmem:[%s12 + $0x2c] sm:$0xf]
        %v1224 = vld [vmem:[%s12 + $0x30] sm:$0xf]
        %v1225 = vld [vmem:[%s12 + $0x34] sm:$0xf]
        %v1226 = vld [vmem:[%s12 + $0x38] sm:$0xf]
        %v1227 = vld [vmem:[%s12 + $0x3c] sm:$0xf]
        %v1228 = vld [vmem:[%s13] sm:$0x1]
        %v1230 = vlaneseq
        %v1231 = vshrl.u32 %v1230, 7
        %v1232 = vsub.s32 0, %v1231
        %v1233 = vrot.slane %v1228, %v1232
        %v1251 = vunpack.c.l.b16 %v1212
        %v1252 = vunpack.c.l.b16 %v1213
        %v1253 = vunpack.c.l.b16 %v1214
        %v1254 = vunpack.c.l.b16 %v1215
        %v1255 = vunpack.c.l.b16 %v1216
        %v1256 = vunpack.c.l.b16 %v1217
        %v1257 = vunpack.c.l.b16 %v1218
        %v1258 = vunpack.c.l.b16 %v1219
        %v1259 = vunpack.c.l.b16 %v1220
        %v1260 = vunpack.c.l.b16 %v1221
        %v1261 = vunpack.c.l.b16 %v1222
        %v1262 = vunpack.c.l.b16 %v1223
        %v1263 = vunpack.c.l.b16 %v1224
        %v1264 = vunpack.c.l.b16 %v1225
        %v1265 = vunpack.c.l.b16 %v1226
        %v1266 = vunpack.c.l.b16 %v1227
        %v1267 = vpack.c.b16 %v1252, %v1251
        %v1268 = vpack.c.b16 %v1254, %v1253
        %v1269 = vpack.c.b16 %v1256, %v1255
        %v1270 = vpack.c.b16 %v1258, %v1257
        %v1271 = vpack.c.b16 %v1260, %v1259
        %v1272 = vpack.c.b16 %v1262, %v1261
        %v1273 = vpack.c.b16 %v1264, %v1263
        %v1274 = vpack.c.b16 %v1266, %v1265
        %1283 = vmatprep.subr.bf16.mxu0 0
        %1284 = vmatpush1.bf16.msra.mxu0 %v1274
        %1285 = vmatprep.subr.bf16.mxu0 0
        %1286 = vmatpush1.bf16.msra.mxu0 %v1273
        %1287 = vmatprep.subr.bf16.mxu0 0
        %1288 = vmatpush1.bf16.msra.mxu0 %v1272
        %1289 = vmatprep.subr.bf16.mxu0 0
        %1290 = vmatpush1.bf16.msra.mxu0 %v1271
        %1291 = vmatprep.subr.bf16.mxu0 0
        %1292 = vmatpush1.bf16.msra.mxu0 %v1270
        %1293 = vmatprep.subr.bf16.mxu0 0
        %1294 = vmatpush1.bf16.msra.mxu0 %v1269
        %1295 = vmatprep.subr.bf16.mxu0 0
        %1296 = vmatpush1.bf16.msra.mxu0 %v1268
        %1297 = vmatprep.subr.bf16.mxu0 0
        %1298 = vmatpush1.bf16.msra.mxu0 %v1267
        %1299 = vmatprep.subr.bf16.mxu0 0
        %1300 = vmatpush2.bf16.msra.mxu0 0
        %1301 = vmatprep.subr.bf16.mxu0 0
        %1302 = vmatpush2.bf16.msra.mxu0 0
        %1303 = vmatprep.subr.bf16.mxu0 0
        %1304 = vmatpush2.bf16.msra.mxu0 0
        %1305 = vmatprep.subr.bf16.mxu0 0
        %1306 = vmatpush2.bf16.msra.mxu0 0
        %1307 = vmatprep.subr.bf16.mxu0 0
        %1308 = vmatpush2.bf16.msra.mxu0 0
        %1309 = vmatprep.subr.bf16.mxu0 0
        %1310 = vmatpush2.bf16.msra.mxu0 0
        %1311 = vmatprep.subr.bf16.mxu0 0
        %1312 = vmatpush2.bf16.msra.mxu0 0
        %1313 = vmatprep.subr.bf16.mxu0 0
        %1314 = vmatpush2.bf16.msra.mxu0 0
        %1315 = vmatprep.mubr.bf16.mxu0 0
        %1316 = vmatmul.mubr.bf16.gmra.mxu0 %v1211
        %v1317 = vpop.f32.mrf.mxu0
        %v1318 = vadd.f32 %v1233, %v1317
        %v1319 = vpop.f32.mrf.mxu0
        %v1320 = vpop.f32.mrf.mxu0
        %v1321 = vpop.f32.mrf.mxu0
        %1322 = vdwg.mxu0
        %v1323 = vadd.f32 %v1098, %v1318
        %v1324 = vpack.c.bf16 %v1323, %v1323
        %vm1325 = vcmask 257024
        %1326 = vst.msk [vmem:[%s438] sm:$0xf] %vm1325, %v1324
        %s1327 = sand.u32 %s320, 1
        %s1328 = scalar_lea.sflag [#allocation5], %s1327
        %s1329 = sand.u32 %s320, 1
        %s1330 = smul.addr %s1329, 4
        %s1331 = scalar_lea.vmem [#allocation4], %s1330
        // Predicated region
        $region73: #{tpu_custom_call.1} parent=71 // pred_check
          %p1332 = pneg %p330
        $region74: #{tpu_custom_call.1} parent=71 // pred_check_branch
          %1334 = sbr.rel (%p1332) target = $region76
        $region75: #{tpu_custom_call.1} parent=71 // pred_region
          %s1336 = ssub.s32 64, 64
          %1337 = vsyncadd %s1328, %s1336
          %s1338 = smul.addr %s34, 64
          %s1339 = scalar_lea.hbm %s14, %s1338
          %s1341 = sshll.u32 %s1331, 4
          %s1342 = int_to_ptr.vmem [resolvable:$true] %s1341
          %1344 = dma.vmem_to_hbm [thread:$0]  %s1342, 64, %s1339, %s1328
        $region76: #{tpu_custom_call.1} parent=71 // pred_fallthru
          _
      $region72: #{tpu_custom_call.1} parent=5 // pred_fallthru
        _
      %p1345 = scmp.le.s32.totalorder 2, %s29
      // Predicated region
      $region77: #{tpu_custom_call.1} parent=5 // pred_check
        %p1346 = pneg %p1345
      $region78: #{tpu_custom_call.1} parent=5 // pred_check_branch
        %1348 = sbr.rel (%p1346) target = $region80
      $region79: #{tpu_custom_call.1} parent=5 // pred_region
        %s1349 = ssub.s32 %s29, 2
        // Predicated region
        $region81: #{tpu_custom_call.1} parent=79 // pred_check
          %p1350 = pneg %p336
        $region82: #{tpu_custom_call.1} parent=79 // pred_check_branch
          %1352 = sbr.rel (%p1350) target = $region84
        $region83: #{tpu_custom_call.1} parent=79 // pred_region
          %s1353 = sand.u32 %s321, 1
          %s1354 = scalar_lea.sflag [#allocation5], %s1353
          %s1355 = sand.u32 %s321, 1
          %s1356 = smul.addr %s1355, 4
          %s1357 = scalar_lea.vmem [#allocation4], %s1356
          %1358 = dma.done %s1354, 64
        $region84: #{tpu_custom_call.1} parent=79 // pred_fallthru
          _
      $region80: #{tpu_custom_call.1} parent=5 // pred_fallthru
        _
    $region6: #{tpu_custom_call.1} parent=1 // loop_footer
      %s33 = sadd.s32 1, %s29
    $region7: #{tpu_custom_call.1} parent=1 // loop_footer_branch
      %28 = sbr.rel target = $region3
    $region8: #{tpu_custom_call.1} parent=1 // loop_exit
      _
    %1359 = vsyncpa [#allocation5], 1
    %s1360 = scalar_lea.sflag [#allocation5], 1
    %1361 = vsyncpa %s1360, 1

</llo_original>
